<compile_context>
chip_gen: v7x
topology: tpu7x:2x2x1
jax: 0.10.0
libtpu: 0.0.40
codegen_flags: <defaults>
</compile_context>

<pallas_src>
import jax
import jax.numpy as jnp
from jax.experimental import pallas as pl
from jax.experimental.pallas import tpu as pltpu


def _round_up(x: int, m: int) -> int:
    return (x + m - 1) // m * m


def _vmem_limit_bytes() -> int:
    """Generation-aware scoped-VMEM limit (headroom on v7x's 64 MiB)."""
    try:
        cap = int(pltpu.get_tpu_info().vmem_capacity_bytes)
    except Exception:
        cap = 128 * 1024 * 1024
    return max(16 * 1024 * 1024, min(cap * 3 // 5, 64 * 1024 * 1024))


def _tile_candidates(total: int, cap: int):
    """Multiples of 128 that divide `total`, <= cap, descending."""
    cap = min(cap, total)
    cands = [c for c in range(128, cap + 1, 128) if total % c == 0]
    return sorted(cands, reverse=True) if cands else [128]


def _fusioner_kernel(x1_ref, x2_ref, w1_ref, w2_ref, b_ref, o_ref):
    """Collapsed-K: full F depth resident, one store per (tm, tn) tile."""
    acc = jnp.dot(x1_ref[...], w1_ref[...], preferred_element_type=jnp.float32)
    acc = acc + jnp.dot(x2_ref[...], w2_ref[...],
                        preferred_element_type=jnp.float32)
    o_ref[...] = (acc + b_ref[...]).astype(o_ref.dtype)


def _fusioner_kernel_ksplit(x1_ref, x2_ref, w1_ref, w2_ref, b_ref, o_ref,
                            acc_ref):
    """K-split fallback for very large F: f32 VMEM accumulator over K."""
    k = pl.program_id(2)

    @pl.when(k == 0)
    def _():
        acc_ref[...] = jnp.zeros_like(acc_ref)

    acc_ref[...] += jnp.dot(x1_ref[...], w1_ref[...],
                            preferred_element_type=jnp.float32)
    acc_ref[...] += jnp.dot(x2_ref[...], w2_ref[...],
                            preferred_element_type=jnp.float32)

    @pl.when(k == pl.num_programs(2) - 1)
    def _():
        o_ref[...] = (acc_ref[...] + b_ref[...]).astype(o_ref.dtype)


def prepare_fusioner_params(weight, bias, *, compute_dtype=None):
    """One-time parameter prep (do NOT call per forward).

    weight: [O, 2F] (PyTorch nn.Linear layout), bias: [O].
    Splits the weight into the two K=F halves, transposes to [F, O],
    optionally casts to `compute_dtype` (e.g. bf16 on v6e/v7x), and zero-pads
    to 128-multiples once so the forward path never re-materializes it.
    """
    weight = jnp.asarray(weight)
    bias = jnp.asarray(bias)
    O, K = weight.shape
    assert K % 2 == 0, "weight must be Linear(2*feat_size, output_size)"
    F = K // 2
    if compute_dtype is None:
        compute_dtype = weight.dtype

    w1 = jnp.asarray(weight[:, :F].T, dtype=compute_dtype)   # [F, O]
    w2 = jnp.asarray(weight[:, F:].T, dtype=compute_dtype)   # [F, O]
    b2d = bias.astype(jnp.float32).reshape(1, O)              # bias stays f32

    Fp = _round_up(F, 128)
    Op = _round_up(O, 128)
    if (Fp, Op) != (F, O):
        w1_p = jnp.pad(w1, ((0, Fp - F), (0, Op - O)))
        w2_p = jnp.pad(w2, ((0, Fp - F), (0, Op - O)))
    else:
        w1_p, w2_p = w1, w2
    bias_p = jnp.pad(b2d, ((0, 0), (0, Op - O))) if Op != O else b2d

    return {
        "F": F, "O": O, "Fp": Fp, "Op": Op,
        "w1": w1, "w2": w2, "b": b2d,            # unpadded: tiny-shape fallback
        "w1_p": w1_p, "w2_p": w2_p, "bias_p": bias_p,
    }


def nn_fusioner_forward(feat_1, feat_2, params, *, force_pallas=False,
                        tm_max=256, tn_max=512):
    """feat_1, feat_2: [B, F]; params: from prepare_fusioner_params."""
    B, F = feat_1.shape
    assert feat_2.shape == (B, F) and F == params["F"]
    O, Fp, Op = params["O"], params["Fp"], params["Op"]
    out_dtype = feat_1.dtype
    cdt = params["w1_p"].dtype

    # Tiny-shape fallback: pallas_call fixed cost + pad/slice would dominate.
    if not force_pallas and (2 * B * 2 * F * O) < (1 << 22):
        out = (jnp.dot(feat_1.astype(cdt), params["w1"],
                       preferred_element_type=jnp.float32)
               + jnp.dot(feat_2.astype(cdt), params["w2"],
                         preferred_element_type=jnp.float32)
               + params["b"])
        return out.astype(out_dtype)

    isz = jnp.dtype(cdt).itemsize
    out_isz = jnp.dtype(out_dtype).itemsize
    sub_mult = 8 if isz >= 4 else 16            # bf16 sublane packing

    tm = min(tm_max, _round_up(B, sub_mult))
    Bp = _round_up(B, tm)
    m_blocks = Bp // tm

    vmem_limit = _vmem_limit_bytes()
    budget = vmem_limit * 4 // 5                 # headroom under scoped limit

    def fits(tn_, tk_):
        # double-buffered inputs + double-buffered output + bias row
        return (2 * (2 * tm * tk_ * isz + 2 * tk_ * tn_ * isz + tn_ * 4)
                + 2 * tm * tn_ * out_isz) <= budget

    tn_cands = _tile_candidates(Op, tn_max)
    if m_blocks == 1:
        # v7x megacore: prefer >=2 parallel N blocks when batch gives only 1 M block.
        split = [c for c in tn_cands if Op // c >= 2]
        if split:
            tn_cands = split
    tk_cands = _tile_candidates(Fp, Fp)          # starts at Fp -> collapsed K first

    tn = tk = None
    for tk_c in tk_cands:
        for tn_c in tn_cands:
            if fits(tn_c, tk_c):
                tn, tk = tn_c, tk_c
                break
        if tn is not None:
            break
    if tn is None:                               # extreme sizes: minimal safe tiles
        tm = min(tm, _round_up(min(B, 128), sub_mult))
        Bp = _round_up(B, tm)
        m_blocks = Bp // tm
        tn, tk = 128, 128

    n_blocks = Op // tn
    k_blocks = Fp // tk

    # Per-forward activation padding only (weights were padded once in prepare).
    x1 = feat_1.astype(cdt)
    x2 = feat_2.astype(cdt)
    if (Bp, Fp) != (B, F):
        pad = ((0, Bp - B), (0, Fp - F))
        x1 = jnp.pad(x1, pad)
        x2 = jnp.pad(x2, pad)

    cost = pl.CostEstimate(
        flops=2 * Bp * (2 * Fp) * Op,
        transcendentals=0,
        bytes_accessed=(2 * Bp * Fp * isz + 2 * Fp * Op * isz
                        + Bp * Op * out_isz + Op * 4),
    )

    if k_blocks == 1:
        grid = (m_blocks, n_blocks)
        in_specs = [
            pl.BlockSpec((tm, tk), lambda i, j: (i, 0)),      # feat_1
            pl.BlockSpec((tm, tk), lambda i, j: (i, 0)),      # feat_2
            pl.BlockSpec((tk, tn), lambda i, j: (0, j)),      # W top half [F, O]
            pl.BlockSpec((tk, tn), lambda i, j: (0, j)),      # W bottom half
            pl.BlockSpec((1, tn), lambda i, j: (0, j)),       # bias row
        ]
        out_specs = pl.BlockSpec((tm, tn), lambda i, j: (i, j))
        kernel = _fusioner_kernel
        scratch = []
        dims = ("parallel", "parallel")
    else:
        grid = (m_blocks, n_blocks, k_blocks)
        in_specs = [
            pl.BlockSpec((tm, tk), lambda i, j, k: (i, k)),
            pl.BlockSpec((tm, tk), lambda i, j, k: (i, k)),
            pl.BlockSpec((tk, tn), lambda i, j, k: (k, j)),
            pl.BlockSpec((tk, tn), lambda i, j, k: (k, j)),
            pl.BlockSpec((1, tn), lambda i, j, k: (0, j)),
        ]
        out_specs = pl.BlockSpec((tm, tn), lambda i, j, k: (i, j))
        kernel = _fusioner_kernel_ksplit
        scratch = [pltpu.VMEM((tm, tn), jnp.float32)]
        dims = ("parallel", "parallel", "arbitrary")

    out = pl.pallas_call(
        kernel,
        out_shape=jax.ShapeDtypeStruct((Bp, Op), out_dtype),
        grid=grid,
        in_specs=in_specs,
        out_specs=out_specs,
        scratch_shapes=scratch,
        compiler_params=pltpu.CompilerParams(
            dimension_semantics=dims,
            vmem_limit_bytes=vmem_limit,
        ),
        cost_estimate=cost,
    )(x1, x2, params["w1_p"], params["w2_p"], params["bias_p"])

    if (Bp, Op) != (B, O):
        out = out[:B, :O]
    return out


if __name__ == "__main__":
    key = jax.random.PRNGKey(0)

    def make_case(k, batch, feat_size, output_size):
        k1, k2, kw, kb = jax.random.split(k, 4)
        f1 = jax.random.normal(k1, (batch, feat_size), dtype=jnp.float32)
        f2 = jax.random.normal(k2, (batch, feat_size), dtype=jnp.float32)
        fan_in = 2 * feat_size
        bound = 1.0 / (fan_in ** 0.5)
        w = jax.random.uniform(kw, (output_size, fan_in),
                               minval=-bound, maxval=bound, dtype=jnp.float32)
        b = jax.random.uniform(kb, (output_size,),
                               minval=-bound, maxval=bound, dtype=jnp.float32)
        return f1, f2, w, b

    # Use highest matmul precision in the test so the Pallas kernel and the
    # plain-XLA reference agree tightly (production keeps the default).
    with jax.default_matmul_precision("highest"):
        ka, kb_ = jax.random.split(key)

        # Case 1: tiny shape typical of the module. Force the Pallas path so
        # the kernel itself runs; also exercise the XLA tiny-shape fallback.
        f1, f2, w, b = make_case(ka, 8, 64, 128)
        params = prepare_fusioner_params(w, b)
        jax.block_until_ready(jax.tree_util.tree_leaves(params))

        out_pallas = jax.block_until_ready(
            nn_fusioner_forward(f1, f2, params, force_pallas=True))
        out_fallback = jax.block_until_ready(nn_fusioner_forward(f1, f2, params))
        ref = jnp.concatenate([f1, f2], axis=-1) @ w.T + b
        assert out_pallas.shape == (8, 128)
        assert jnp.allclose(out_pallas, ref, atol=1e-4, rtol=1e-4)
        assert jnp.allclose(out_fallback, ref, atol=1e-4, rtol=1e-4)

        # Case 2: shape that naturally takes the tiled Pallas path
        # (collapsed K, N split into 2 parallel blocks for v7x megacore).
        f1, f2, w, b = make_case(kb_, 256, 256, 512)
        params = prepare_fusioner_params(w, b)
        out = jax.block_until_ready(nn_fusioner_forward(f1, f2, params))
        ref = jnp.concatenate([f1, f2], axis=-1) @ w.T + b
        assert out.shape == (256, 512)
        assert jnp.allclose(out, ref, atol=1e-4, rtol=1e-4)

    print("KERNEL_OK")
</pallas_src>

<mosaic_0001>
module attributes {stable_mosaic.version = 11 : i64} {
  func.func @_fusioner_kernel(%arg0: i32, %arg1: i32, %arg2: memref<8x128xf32, #tpu.memory_space<vmem>>, %arg3: memref<8x128xf32, #tpu.memory_space<vmem>>, %arg4: memref<128x128xf32, #tpu.memory_space<vmem>>, %arg5: memref<128x128xf32, #tpu.memory_space<vmem>>, %arg6: memref<1x128xf32, #tpu.memory_space<vmem>>, %arg7: memref<8x128xf32, #tpu.memory_space<vmem>>) attributes {dimension_semantics = [#tpu.dimension_semantics<parallel>, #tpu.dimension_semantics<parallel>], iteration_bounds = array<i64: 1, 1>, scalar_prefetch = 0 : i64, scratch_operands = 0 : i64, tpu.core_type = #tpu.core_type<tc>, window_params = [{transform_indices = @transform_0, window_bounds = array<i64: 8, 128>}, {transform_indices = @transform_1, window_bounds = array<i64: 8, 128>}, {transform_indices = @transform_2, window_bounds = array<i64: 128, 128>}, {transform_indices = @transform_3, window_bounds = array<i64: 128, 128>}, {transform_indices = @transform_4, window_bounds = array<i64: 1, 128>}, {transform_indices = @transform_5, window_bounds = array<i64: 8, 128>}]} {
    %c0 = arith.constant 0 : index
    %c0_0 = arith.constant 0 : index
    %0 = vector.load %arg2[%c0, %c0_0] : memref<8x128xf32, #tpu.memory_space<vmem>>, vector<8x128xf32>
    %c0_1 = arith.constant 0 : index
    %c0_2 = arith.constant 0 : index
    %1 = vector.load %arg4[%c0_1, %c0_2] : memref<128x128xf32, #tpu.memory_space<vmem>>, vector<128x128xf32>
    %cst = arith.constant dense<0.000000e+00> : vector<8x128xf32>
    %2 = tpu.matmul %0, %1, %cst {dimension_numbers = #tpu.dot_dimension_numbers<[1], [0], [0], [1], [0, 0, 1, 1], [], []>, precision = #tpu.contract_precision<fp32>} : vector<8x128xf32>, vector<128x128xf32>, vector<8x128xf32> -> vector<8x128xf32>
    %c0_3 = arith.constant 0 : index
    %c0_4 = arith.constant 0 : index
    %3 = vector.load %arg3[%c0_3, %c0_4] : memref<8x128xf32, #tpu.memory_space<vmem>>, vector<8x128xf32>
    %c0_5 = arith.constant 0 : index
    %c0_6 = arith.constant 0 : index
    %4 = vector.load %arg5[%c0_5, %c0_6] : memref<128x128xf32, #tpu.memory_space<vmem>>, vector<128x128xf32>
    %cst_7 = arith.constant dense<0.000000e+00> : vector<8x128xf32>
    %5 = tpu.matmul %3, %4, %cst_7 {dimension_numbers = #tpu.dot_dimension_numbers<[1], [0], [0], [1], [0, 0, 1, 1], [], []>, precision = #tpu.contract_precision<fp32>} : vector<8x128xf32>, vector<128x128xf32>, vector<8x128xf32> -> vector<8x128xf32>
    %6 = arith.addf %2, %5 : vector<8x128xf32>
    %c0_8 = arith.constant 0 : index
    %c0_9 = arith.constant 0 : index
    %7 = vector.load %arg6[%c0_8, %c0_9] : memref<1x128xf32, #tpu.memory_space<vmem>>, vector<1x128xf32>
    %8 = vector.broadcast %7 : vector<1x128xf32> to vector<8x128xf32>
    %9 = arith.addf %6, %8 : vector<8x128xf32>
    %c0_10 = arith.constant 0 : index
    %c0_11 = arith.constant 0 : index
    %10 = vector.load %arg7[%c0_10, %c0_11] : memref<8x128xf32, #tpu.memory_space<vmem>>, vector<8x128xf32>
    tpu.vector_store %arg7[%c0_10, %c0_11], %9 {strides = array<i32>} : memref<8x128xf32, #tpu.memory_space<vmem>>, vector<8x128xf32>,
    return
  }
  func.func @transform_0(%arg0: i32, %arg1: i32) -> (i32, i32) {
    %c0_i32 = arith.constant 0 : i32
    %c0_i32_0 = arith.constant 0 : i32
    return %arg0, %c0_i32 : i32, i32
  }
  func.func @transform_1(%arg0: i32, %arg1: i32) -> (i32, i32) {
    %c0_i32 = arith.constant 0 : i32
    %c0_i32_0 = arith.constant 0 : i32
    return %arg0, %c0_i32 : i32, i32
  }
  func.func @transform_2(%arg0: i32, %arg1: i32) -> (i32, i32) {
    %c0_i32 = arith.constant 0 : i32
    %c0_i32_0 = arith.constant 0 : i32
    return %c0_i32, %arg1 : i32, i32
  }
  func.func @transform_3(%arg0: i32, %arg1: i32) -> (i32, i32) {
    %c0_i32 = arith.constant 0 : i32
    %c0_i32_0 = arith.constant 0 : i32
    return %c0_i32, %arg1 : i32, i32
  }
  func.func @transform_4(%arg0: i32, %arg1: i32) -> (i32, i32) {
    %c0_i32 = arith.constant 0 : i32
    %c0_i32_0 = arith.constant 0 : i32
    return %c0_i32, %arg1 : i32, i32
  }
  func.func @transform_5(%arg0: i32, %arg1: i32) -> (i32, i32) {
    %c0_i32 = arith.constant 0 : i32
    return %arg0, %arg1 : i32, i32
  }
}

</mosaic_0001>

<llo_original>
// kernel: tpu_custom_call.1
$region0: #{tpu_custom_call.1}
  #allocation0 [shape = 'u32[]', space=smem, size = 0x4, offset = 0x4, fixed_abs, tag = 'smem constant byte address 0x4 - core index']
  #allocation1 [shape = 'u32[144,128]{1,0:T(1,128)}', space=vmem, size = 0x12000, scoped, tag = 'internal scratch']
  %s0 = inlined_call_operand.hbm [shape: f32[8,128], index: 0, kind: input, shape index: {}]
  %s1 = inlined_call_operand.hbm [shape: f32[8,128], index: 1, kind: input, shape index: {}]
  %s2 = inlined_call_operand.hbm [shape: f32[128,128], index: 2, kind: input, shape index: {}]
  %s3 = inlined_call_operand.hbm [shape: f32[128,128], index: 3, kind: input, shape index: {}]
  %s4 = inlined_call_operand.hbm [shape: f32[1,128], index: 4, kind: input, shape index: {}]
  %s5 = inlined_call_operand.hbm [shape: f32[8,128], index: 5, kind: output, shape index: {}]
  %s6 = sld [smem:[#allocation0]]
  $region50: #{tpu_custom_call.1} parent=0
    _
  %s8 = ssub.s32 1, %s6
  %s9 = scalar_select 0, %s8, %s6
  $region1: #{tpu_custom_call.1} parent=0
    #allocation2 [shape = 'u8[4096]{0}', space=vmem, size = 0x1000, scoped, tag = 'input window, operand 0, single buffered']
    #allocation3 [shape = 's32[1]{0}', space=sflag, size = 0x4, scoped, tag = 'scoped memory for tpu_custom_call.1']
    #allocation4 [shape = 's32[1]{0}', space=sflag, size = 0x4, scoped, tag = 'scoped memory for tpu_custom_call.1']
    #allocation5 [shape = 'u8[4096]{0}', space=vmem, size = 0x1000, scoped, tag = 'input window, operand 1, single buffered']
    #allocation6 [shape = 's32[1]{0}', space=sflag, size = 0x4, scoped, tag = 'scoped memory for tpu_custom_call.1']
    #allocation7 [shape = 'u8[65536]{0}', space=vmem, size = 0x10000, scoped, tag = 'input window, operand 2, single buffered']
    #allocation8 [shape = 'u8[65536]{0}', space=vmem, size = 0x10000, scoped, tag = 'input window, operand 3, single buffered']
    #allocation9 [shape = 's32[1]{0}', space=sflag, size = 0x4, scoped, tag = 'scoped memory for tpu_custom_call.1']
    #allocation10 [shape = 'u8[512]{0}', space=vmem, size = 0x400, scoped, tag = 'input window, operand 4, single buffered']
    #allocation11 [shape = 'u8[4096]{0}', space=vmem, size = 0x1000, scoped, tag = 'output window, operand 0, single buffered']
    %10 = vsyncpa [#allocation3], 0
    %11 = vsyncpa [#allocation6], 0
    %12 = vsyncpa [#allocation9], 0
    %13 = vsyncpa [#allocation4], 0
    // Predicated region
    $region2: #{tpu_custom_call.1} parent=1 // pred_check
      _
    $region3: #{tpu_custom_call.1} parent=1 // pred_check_branch
      %15 = sbr.rel (0) target = $region5
    $region4: #{tpu_custom_call.1} parent=1 // pred_region
      %s17 = ssub.s32 128, 128
      %18 = vsyncadd [#allocation3], %s17
      %s20 = sshll.u32 [#allocation2], 4
      %s21 = int_to_ptr.vmem [resolvable:$true] %s20
      %23 = dma.hbm_to_vmem [thread:$0]  %s0, 128, %s21, [#allocation3]
    $region5: #{tpu_custom_call.1} parent=1 // pred_fallthru
      _
    // Predicated region
    $region6: #{tpu_custom_call.1} parent=1 // pred_check
      _
    $region7: #{tpu_custom_call.1} parent=1 // pred_check_branch
      %25 = sbr.rel (0) target = $region9
    $region8: #{tpu_custom_call.1} parent=1 // pred_region
      %s27 = ssub.s32 128, 128
      %28 = vsyncadd [#allocation6], %s27
      %s30 = sshll.u32 [#allocation5], 4
      %s31 = int_to_ptr.vmem [resolvable:$true] %s30
      %33 = dma.hbm_to_vmem [thread:$0]  %s1, 128, %s31, [#allocation6]
    $region9: #{tpu_custom_call.1} parent=1 // pred_fallthru
      _
    // Predicated region
    $region10: #{tpu_custom_call.1} parent=1 // pred_check
      _
    $region11: #{tpu_custom_call.1} parent=1 // pred_check_branch
      %35 = sbr.rel (0) target = $region13
    $region12: #{tpu_custom_call.1} parent=1 // pred_region
      %s37 = ssub.s32 2048, 2048
      %38 = vsyncadd [#allocation6], %s37
      %s39 = sshll.u32 [#allocation7], 4
      %s40 = int_to_ptr.vmem [resolvable:$true] %s39
      %45 = dma.hbm_to_vmem [thread:$0]  %s2, 2048, %s40, [#allocation6], 128, 128, 8
    $region13: #{tpu_custom_call.1} parent=1 // pred_fallthru
      _
    // Predicated region
    $region14: #{tpu_custom_call.1} parent=1 // pred_check
      _
    $region15: #{tpu_custom_call.1} parent=1 // pred_check_branch
      %47 = sbr.rel (0) target = $region17
    $region16: #{tpu_custom_call.1} parent=1 // pred_region
      %s49 = ssub.s32 2048, 2048
      %50 = vsyncadd [#allocation9], %s49
      %s51 = sshll.u32 [#allocation8], 4
      %s52 = int_to_ptr.vmem [resolvable:$true] %s51
      %57 = dma.hbm_to_vmem [thread:$0]  %s3, 2048, %s52, [#allocation9], 128, 128, 8
    $region17: #{tpu_custom_call.1} parent=1 // pred_fallthru
      _
    // Predicated region
    $region18: #{tpu_custom_call.1} parent=1 // pred_check
      _
    $region19: #{tpu_custom_call.1} parent=1 // pred_check_branch
      %59 = sbr.rel (0) target = $region21
    $region20: #{tpu_custom_call.1} parent=1 // pred_region
      %s61 = ssub.s32 16, 16
      %62 = vsyncadd [#allocation9], %s61
      %s64 = sshll.u32 [#allocation10], 4
      %s65 = int_to_ptr.vmem [resolvable:$true] %s64
      %67 = dma.hbm_to_vmem [thread:$0]  %s4, 16, %s65, [#allocation9]
    $region21: #{tpu_custom_call.1} parent=1 // pred_fallthru
      _
    // Predicated region
    $region22: #{tpu_custom_call.1} parent=1 // pred_check
      _
    $region23: #{tpu_custom_call.1} parent=1 // pred_check_branch
      %69 = sbr.rel (0) target = $region25
    $region24: #{tpu_custom_call.1} parent=1 // pred_region
      %70 = dma.done [#allocation3], 128
    $region25: #{tpu_custom_call.1} parent=1 // pred_fallthru
      _
    // Predicated region
    $region26: #{tpu_custom_call.1} parent=1 // pred_check
      _
    $region27: #{tpu_custom_call.1} parent=1 // pred_check_branch
      %72 = sbr.rel (0) target = $region29
    $region28: #{tpu_custom_call.1} parent=1 // pred_region
      %73 = dma.done [#allocation6], 128
    $region29: #{tpu_custom_call.1} parent=1 // pred_fallthru
      _
    // Predicated region
    $region30: #{tpu_custom_call.1} parent=1 // pred_check
      _
    $region31: #{tpu_custom_call.1} parent=1 // pred_check_branch
      %75 = sbr.rel (0) target = $region33
    $region32: #{tpu_custom_call.1} parent=1 // pred_region
      %76 = dma.done [#allocation6], 2048
    $region33: #{tpu_custom_call.1} parent=1 // pred_fallthru
      _
    // Predicated region
    $region34: #{tpu_custom_call.1} parent=1 // pred_check
      _
    $region35: #{tpu_custom_call.1} parent=1 // pred_check_branch
      %78 = sbr.rel (0) target = $region37
    $region36: #{tpu_custom_call.1} parent=1 // pred_region
      %79 = dma.done [#allocation9], 2048
    $region37: #{tpu_custom_call.1} parent=1 // pred_fallthru
      _
    // Predicated region
    $region38: #{tpu_custom_call.1} parent=1 // pred_check
      _
    $region39: #{tpu_custom_call.1} parent=1 // pred_check_branch
      %81 = sbr.rel (0) target = $region41
    $region40: #{tpu_custom_call.1} parent=1 // pred_region
      %82 = dma.done [#allocation9], 16
    $region41: #{tpu_custom_call.1} parent=1 // pred_fallthru
      _
    %v83 = vld [vmem:[#allocation2] sm:$0xff]
    %v84 = vld [vmem:[#allocation7] sm:$0xff]
    %v85 = vld [vmem:[#allocation7 + $0x8] sm:$0xff]
    %v86 = vld [vmem:[#allocation7 + $0x10] sm:$0xff]
    %v87 = vld [vmem:[#allocation7 + $0x18] sm:$0xff]
    %v88 = vld [vmem:[#allocation7 + $0x20] sm:$0xff]
    %v89 = vld [vmem:[#allocation7 + $0x28] sm:$0xff]
    %v90 = vld [vmem:[#allocation7 + $0x30] sm:$0xff]
    %v91 = vld [vmem:[#allocation7 + $0x38] sm:$0xff]
    %v92 = vld [vmem:[#allocation7 + $0x40] sm:$0xff]
    %v93 = vld [vmem:[#allocation7 + $0x48] sm:$0xff]
    %v94 = vld [vmem:[#allocation7 + $0x50] sm:$0xff]
    %v95 = vld [vmem:[#allocation7 + $0x58] sm:$0xff]
    %v96 = vld [vmem:[#allocation7 + $0x60] sm:$0xff]
    %v97 = vld [vmem:[#allocation7 + $0x68] sm:$0xff]
    %v98 = vld [vmem:[#allocation7 + $0x70] sm:$0xff]
    %v99 = vld [vmem:[#allocation7 + $0x78] sm:$0xff]
    %v100 = vld [vmem:[#allocation5] sm:$0xff]
    %v101 = vld [vmem:[#allocation8] sm:$0xff]
    %v102 = vld [vmem:[#allocation8 + $0x8] sm:$0xff]
    %v103 = vld [vmem:[#allocation8 + $0x10] sm:$0xff]
    %v104 = vld [vmem:[#allocation8 + $0x18] sm:$0xff]
    %v105 = vld [vmem:[#allocation8 + $0x20] sm:$0xff]
    %v106 = vld [vmem:[#allocation8 + $0x28] sm:$0xff]
    %v107 = vld [vmem:[#allocation8 + $0x30] sm:$0xff]
    %v108 = vld [vmem:[#allocation8 + $0x38] sm:$0xff]
    %v109 = vld [vmem:[#allocation8 + $0x40] sm:$0xff]
    %v110 = vld [vmem:[#allocation8 + $0x48] sm:$0xff]
    %v111 = vld [vmem:[#allocation8 + $0x50] sm:$0xff]
    %v112 = vld [vmem:[#allocation8 + $0x58] sm:$0xff]
    %v113 = vld [vmem:[#allocation8 + $0x60] sm:$0xff]
    %v114 = vld [vmem:[#allocation8 + $0x68] sm:$0xff]
    %v115 = vld [vmem:[#allocation8 + $0x70] sm:$0xff]
    %v116 = vld [vmem:[#allocation8 + $0x78] sm:$0xff]
    %117 = vmatprep.subr.mxu0 0.0
    %v118 = vand.u32 %v101, 4294901760
    %119 = vmatpush1.msra.mxu0 %v118
    %120 = vmatprep.subr.mxu0 0.0
    %v121 = vand.u32 %v102, 4294901760
    %122 = vmatpush1.msra.mxu0 %v121
    %123 = vmatprep.subr.mxu0 0.0
    %v124 = vand.u32 %v103, 4294901760
    %125 = vmatpush1.msra.mxu0 %v124
    %126 = vmatprep.subr.mxu0 0.0
    %v127 = vand.u32 %v104, 4294901760
    %128 = vmatpush1.msra.mxu0 %v127
    %129 = vmatprep.subr.mxu0 0.0
    %v130 = vand.u32 %v105, 4294901760
    %131 = vmatpush1.msra.mxu0 %v130
    %132 = vmatprep.subr.mxu0 0.0
    %v133 = vand.u32 %v106, 4294901760
    %134 = vmatpush1.msra.mxu0 %v133
    %135 = vmatprep.subr.mxu0 0.0
    %v136 = vand.u32 %v107, 4294901760
    %137 = vmatpush1.msra.mxu0 %v136
    %138 = vmatprep.subr.mxu0 0.0
    %v139 = vand.u32 %v108, 4294901760
    %140 = vmatpush1.msra.mxu0 %v139
    %141 = vmatprep.subr.mxu0 0.0
    %v142 = vand.u32 %v109, 4294901760
    %143 = vmatpush1.msra.mxu0 %v142
    %144 = vmatprep.subr.mxu0 0.0
    %v145 = vand.u32 %v110, 4294901760
    %146 = vmatpush1.msra.mxu0 %v145
    %147 = vmatprep.subr.mxu0 0.0
    %v148 = vand.u32 %v111, 4294901760
    %149 = vmatpush1.msra.mxu0 %v148
    %150 = vmatprep.subr.mxu0 0.0
    %v151 = vand.u32 %v112, 4294901760
    %152 = vmatpush1.msra.mxu0 %v151
    %153 = vmatprep.subr.mxu0 0.0
    %v154 = vand.u32 %v113, 4294901760
    %155 = vmatpush1.msra.mxu0 %v154
    %156 = vmatprep.subr.mxu0 0.0
    %v157 = vand.u32 %v114, 4294901760
    %158 = vmatpush1.msra.mxu0 %v157
    %159 = vmatprep.subr.mxu0 0.0
    %v160 = vand.u32 %v115, 4294901760
    %161 = vmatpush1.msra.mxu0 %v160
    %162 = vmatprep.subr.mxu0 0.0
    %v163 = vand.u32 %v116, 4294901760
    %164 = vmatpush1.msra.mxu0 %v163
    %165 = vmatprep.subr.mxu0 0.0
    %166 = vmatpush1.msra.mxu0 0.0
    %167 = vmatprep.subr.mxu0 0.0
    %168 = vmatpush1.msra.mxu0 0.0
    %169 = vmatprep.subr.mxu0 0.0
    %170 = vmatpush1.msra.mxu0 0.0
    %171 = vmatprep.subr.mxu0 0.0
    %172 = vmatpush1.msra.mxu0 0.0
    %173 = vmatprep.subr.mxu0 0.0
    %174 = vmatpush1.msra.mxu0 0.0
    %175 = vmatprep.subr.mxu0 0.0
    %176 = vmatpush1.msra.mxu0 0.0
    %177 = vmatprep.subr.mxu0 0.0
    %178 = vmatpush1.msra.mxu0 0.0
    %179 = vmatprep.subr.mxu0 0.0
    %180 = vmatpush1.msra.mxu0 0.0
    %181 = vmatprep.subr.mxu0 0.0
    %182 = vmatpush1.msra.mxu0 0.0
    %183 = vmatprep.subr.mxu0 0.0
    %184 = vmatpush1.msra.mxu0 0.0
    %185 = vmatprep.subr.mxu0 0.0
    %186 = vmatpush1.msra.mxu0 0.0
    %187 = vmatprep.subr.mxu0 0.0
    %188 = vmatpush1.msra.mxu0 0.0
    %189 = vmatprep.subr.mxu0 0.0
    %190 = vmatpush1.msra.mxu0 0.0
    %191 = vmatprep.subr.mxu0 0.0
    %192 = vmatpush1.msra.mxu0 0.0
    %193 = vmatprep.subr.mxu0 0.0
    %194 = vmatpush1.msra.mxu0 0.0
    %195 = vmatprep.subr.mxu0 0.0
    %196 = vmatpush1.msra.mxu0 0.0
    %197 = vmatprep.mubr.f32.mxu0 0.0
    %v198 = vand.u32 %v100, 4294901760
    %v199 = vsub.f32 %v100, %v198
    %v200 = vand.u32 %v199, 4294901760
    %v201 = vsub.f32 %v199, %v200
    %v202 = vand.u32 %v201, 4294901760
    %203 = vmatmul.mubr.f32.gmra.mrb[0].mxu0 %v202
    %v204 = vpop.f32.mrb[0].mxu0
    %v205 = vadd.f32 0.0, %v204
    %v206 = vpop.f32.mrb[0].mxu0
    %207 = vdwg.mxu0
    %208 = vmatprep.subr.mxu0 0.0
    %v209 = vand.u32 %v101, 4294901760
    %v210 = vsub.f32 %v101, %v209
    %v211 = vand.u32 %v210, 4294901760
    %v212 = vsub.f32 %v210, %v211
    %v213 = vand.u32 %v212, 4294901760
    %214 = vmatpush1.msra.mxu0 %v213
    %215 = vmatprep.subr.mxu0 0.0
    %v216 = vand.u32 %v102, 4294901760
    %v217 = vsub.f32 %v102, %v216
    %v218 = vand.u32 %v217, 4294901760
    %v219 = vsub.f32 %v217, %v218
    %v220 = vand.u32 %v219, 4294901760
    %221 = vmatpush1.msra.mxu0 %v220
    %222 = vmatprep.subr.mxu0 0.0
    %v223 = vand.u32 %v103, 4294901760
    %v224 = vsub.f32 %v103, %v223
    %v225 = vand.u32 %v224, 4294901760
    %v226 = vsub.f32 %v224, %v225
    %v227 = vand.u32 %v226, 4294901760
    %228 = vmatpush1.msra.mxu0 %v227
    %229 = vmatprep.subr.mxu0 0.0
    %v230 = vand.u32 %v104, 4294901760
    %v231 = vsub.f32 %v104, %v230
    %v232 = vand.u32 %v231, 4294901760
    %v233 = vsub.f32 %v231, %v232
    %v234 = vand.u32 %v233, 4294901760
    %235 = vmatpush1.msra.mxu0 %v234
    %236 = vmatprep.subr.mxu0 0.0
    %v237 = vand.u32 %v105, 4294901760
    %v238 = vsub.f32 %v105, %v237
    %v239 = vand.u32 %v238, 4294901760
    %v240 = vsub.f32 %v238, %v239
    %v241 = vand.u32 %v240, 4294901760
    %242 = vmatpush1.msra.mxu0 %v241
    %243 = vmatprep.subr.mxu0 0.0
    %v244 = vand.u32 %v106, 4294901760
    %v245 = vsub.f32 %v106, %v244
    %v246 = vand.u32 %v245, 4294901760
    %v247 = vsub.f32 %v245, %v246
    %v248 = vand.u32 %v247, 4294901760
    %249 = vmatpush1.msra.mxu0 %v248
    %250 = vmatprep.subr.mxu0 0.0
    %v251 = vand.u32 %v107, 4294901760
    %v252 = vsub.f32 %v107, %v251
    %v253 = vand.u32 %v252, 4294901760
    %v254 = vsub.f32 %v252, %v253
    %v255 = vand.u32 %v254, 4294901760
    %256 = vmatpush1.msra.mxu0 %v255
    %257 = vmatprep.subr.mxu0 0.0
    %v258 = vand.u32 %v108, 4294901760
    %v259 = vsub.f32 %v108, %v258
    %v260 = vand.u32 %v259, 4294901760
    %v261 = vsub.f32 %v259, %v260
    %v262 = vand.u32 %v261, 4294901760
    %263 = vmatpush1.msra.mxu0 %v262
    %264 = vmatprep.subr.mxu0 0.0
    %v265 = vand.u32 %v109, 4294901760
    %v266 = vsub.f32 %v109, %v265
    %v267 = vand.u32 %v266, 4294901760
    %v268 = vsub.f32 %v266, %v267
    %v269 = vand.u32 %v268, 4294901760
    %270 = vmatpush1.msra.mxu0 %v269
    %271 = vmatprep.subr.mxu0 0.0
    %v272 = vand.u32 %v110, 4294901760
    %v273 = vsub.f32 %v110, %v272
    %v274 = vand.u32 %v273, 4294901760
    %v275 = vsub.f32 %v273, %v274
    %v276 = vand.u32 %v275, 4294901760
    %277 = vmatpush1.msra.mxu0 %v276
    %278 = vmatprep.subr.mxu0 0.0
    %v279 = vand.u32 %v111, 4294901760
    %v280 = vsub.f32 %v111, %v279
    %v281 = vand.u32 %v280, 4294901760
    %v282 = vsub.f32 %v280, %v281
    %v283 = vand.u32 %v282, 4294901760
    %284 = vmatpush1.msra.mxu0 %v283
    %285 = vmatprep.subr.mxu0 0.0
    %v286 = vand.u32 %v112, 4294901760
    %v287 = vsub.f32 %v112, %v286
    %v288 = vand.u32 %v287, 4294901760
    %v289 = vsub.f32 %v287, %v288
    %v290 = vand.u32 %v289, 4294901760
    %291 = vmatpush1.msra.mxu0 %v290
    %292 = vmatprep.subr.mxu0 0.0
    %v293 = vand.u32 %v113, 4294901760
    %v294 = vsub.f32 %v113, %v293
    %v295 = vand.u32 %v294, 4294901760
    %v296 = vsub.f32 %v294, %v295
    %v297 = vand.u32 %v296, 4294901760
    %298 = vmatpush1.msra.mxu0 %v297
    %299 = vmatprep.subr.mxu0 0.0
    %v300 = vand.u32 %v114, 4294901760
    %v301 = vsub.f32 %v114, %v300
    %v302 = vand.u32 %v301, 4294901760
    %v303 = vsub.f32 %v301, %v302
    %v304 = vand.u32 %v303, 4294901760
    %305 = vmatpush1.msra.mxu0 %v304
    %306 = vmatprep.subr.mxu0 0.0
    %v307 = vand.u32 %v115, 4294901760
    %v308 = vsub.f32 %v115, %v307
    %v309 = vand.u32 %v308, 4294901760
    %v310 = vsub.f32 %v308, %v309
    %v311 = vand.u32 %v310, 4294901760
    %312 = vmatpush1.msra.mxu0 %v311
    %313 = vmatprep.subr.mxu0 0.0
    %v314 = vand.u32 %v116, 4294901760
    %v315 = vsub.f32 %v116, %v314
    %v316 = vand.u32 %v315, 4294901760
    %v317 = vsub.f32 %v315, %v316
    %v318 = vand.u32 %v317, 4294901760
    %319 = vmatpush1.msra.mxu0 %v318
    %320 = vmatprep.subr.mxu0 0.0
    %321 = vmatpush1.msra.mxu0 0.0
    %322 = vmatprep.subr.mxu0 0.0
    %323 = vmatpush1.msra.mxu0 0.0
    %324 = vmatprep.subr.mxu0 0.0
    %325 = vmatpush1.msra.mxu0 0.0
    %326 = vmatprep.subr.mxu0 0.0
    %327 = vmatpush1.msra.mxu0 0.0
    %328 = vmatprep.subr.mxu0 0.0
    %329 = vmatpush1.msra.mxu0 0.0
    %330 = vmatprep.subr.mxu0 0.0
    %331 = vmatpush1.msra.mxu0 0.0
    %332 = vmatprep.subr.mxu0 0.0
    %333 = vmatpush1.msra.mxu0 0.0
    %334 = vmatprep.subr.mxu0 0.0
    %335 = vmatpush1.msra.mxu0 0.0
    %336 = vmatprep.subr.mxu0 0.0
    %337 = vmatpush1.msra.mxu0 0.0
    %338 = vmatprep.subr.mxu0 0.0
    %339 = vmatpush1.msra.mxu0 0.0
    %340 = vmatprep.subr.mxu0 0.0
    %341 = vmatpush1.msra.mxu0 0.0
    %342 = vmatprep.subr.mxu0 0.0
    %343 = vmatpush1.msra.mxu0 0.0
    %344 = vmatprep.subr.mxu0 0.0
    %345 = vmatpush1.msra.mxu0 0.0
    %346 = vmatprep.subr.mxu0 0.0
    %347 = vmatpush1.msra.mxu0 0.0
    %348 = vmatprep.subr.mxu0 0.0
    %349 = vmatpush1.msra.mxu0 0.0
    %350 = vmatprep.subr.mxu0 0.0
    %351 = vmatpush1.msra.mxu0 0.0
    %352 = vmatprep.mubr.f32.mxu0 0.0
    %v353 = vand.u32 %v100, 4294901760
    %354 = vmatmul.mubr.f32.gmra.mrb[0].mxu0 %v353
    %v355 = vpop.f32.mrb[0].mxu0
    %v356 = vadd.f32 %v205, %v355
    %v357 = vpop.f32.mrb[0].mxu0
    %358 = vdwg.mxu0
    %359 = vmatprep.subr.mxu0 0.0
    %v360 = vand.u32 %v101, 4294901760
    %v361 = vsub.f32 %v101, %v360
    %362 = vmatpush1.msra.mxu0 %v361
    %363 = vmatprep.subr.mxu0 0.0
    %v364 = vand.u32 %v102, 4294901760
    %v365 = vsub.f32 %v102, %v364
    %366 = vmatpush1.msra.mxu0 %v365
    %367 = vmatprep.subr.mxu0 0.0
    %v368 = vand.u32 %v103, 4294901760
    %v369 = vsub.f32 %v103, %v368
    %370 = vmatpush1.msra.mxu0 %v369
    %371 = vmatprep.subr.mxu0 0.0
    %v372 = vand.u32 %v104, 4294901760
    %v373 = vsub.f32 %v104, %v372
    %374 = vmatpush1.msra.mxu0 %v373
    %375 = vmatprep.subr.mxu0 0.0
    %v376 = vand.u32 %v105, 4294901760
    %v377 = vsub.f32 %v105, %v376
    %378 = vmatpush1.msra.mxu0 %v377
    %379 = vmatprep.subr.mxu0 0.0
    %v380 = vand.u32 %v106, 4294901760
    %v381 = vsub.f32 %v106, %v380
    %382 = vmatpush1.msra.mxu0 %v381
    %383 = vmatprep.subr.mxu0 0.0
    %v384 = vand.u32 %v107, 4294901760
    %v385 = vsub.f32 %v107, %v384
    %386 = vmatpush1.msra.mxu0 %v385
    %387 = vmatprep.subr.mxu0 0.0
    %v388 = vand.u32 %v108, 4294901760
    %v389 = vsub.f32 %v108, %v388
    %390 = vmatpush1.msra.mxu0 %v389
    %391 = vmatprep.subr.mxu0 0.0
    %v392 = vand.u32 %v109, 4294901760
    %v393 = vsub.f32 %v109, %v392
    %394 = vmatpush1.msra.mxu0 %v393
    %395 = vmatprep.subr.mxu0 0.0
    %v396 = vand.u32 %v110, 4294901760
    %v397 = vsub.f32 %v110, %v396
    %398 = vmatpush1.msra.mxu0 %v397
    %399 = vmatprep.subr.mxu0 0.0
    %v400 = vand.u32 %v111, 4294901760
    %v401 = vsub.f32 %v111, %v400
    %402 = vmatpush1.msra.mxu0 %v401
    %403 = vmatprep.subr.mxu0 0.0
    %v404 = vand.u32 %v112, 4294901760
    %v405 = vsub.f32 %v112, %v404
    %406 = vmatpush1.msra.mxu0 %v405
    %407 = vmatprep.subr.mxu0 0.0
    %v408 = vand.u32 %v113, 4294901760
    %v409 = vsub.f32 %v113, %v408
    %410 = vmatpush1.msra.mxu0 %v409
    %411 = vmatprep.subr.mxu0 0.0
    %v412 = vand.u32 %v114, 4294901760
    %v413 = vsub.f32 %v114, %v412
    %414 = vmatpush1.msra.mxu0 %v413
    %415 = vmatprep.subr.mxu0 0.0
    %v416 = vand.u32 %v115, 4294901760
    %v417 = vsub.f32 %v115, %v416
    %418 = vmatpush1.msra.mxu0 %v417
    %419 = vmatprep.subr.mxu0 0.0
    %v420 = vand.u32 %v116, 4294901760
    %v421 = vsub.f32 %v116, %v420
    %422 = vmatpush1.msra.mxu0 %v421
    %423 = vmatprep.subr.mxu0 0.0
    %424 = vmatpush1.msra.mxu0 0.0
    %425 = vmatprep.subr.mxu0 0.0
    %426 = vmatpush1.msra.mxu0 0.0
    %427 = vmatprep.subr.mxu0 0.0
    %428 = vmatpush1.msra.mxu0 0.0
    %429 = vmatprep.subr.mxu0 0.0
    %430 = vmatpush1.msra.mxu0 0.0
    %431 = vmatprep.subr.mxu0 0.0
    %432 = vmatpush1.msra.mxu0 0.0
    %433 = vmatprep.subr.mxu0 0.0
    %434 = vmatpush1.msra.mxu0 0.0
    %435 = vmatprep.subr.mxu0 0.0
    %436 = vmatpush1.msra.mxu0 0.0
    %437 = vmatprep.subr.mxu0 0.0
    %438 = vmatpush1.msra.mxu0 0.0
    %439 = vmatprep.subr.mxu0 0.0
    %440 = vmatpush1.msra.mxu0 0.0
    %441 = vmatprep.subr.mxu0 0.0
    %442 = vmatpush1.msra.mxu0 0.0
    %443 = vmatprep.subr.mxu0 0.0
    %444 = vmatpush1.msra.mxu0 0.0
    %445 = vmatprep.subr.mxu0 0.0
    %446 = vmatpush1.msra.mxu0 0.0
    %447 = vmatprep.subr.mxu0 0.0
    %448 = vmatpush1.msra.mxu0 0.0
    %449 = vmatprep.subr.mxu0 0.0
    %450 = vmatpush1.msra.mxu0 0.0
    %451 = vmatprep.subr.mxu0 0.0
    %452 = vmatpush1.msra.mxu0 0.0
    %453 = vmatprep.subr.mxu0 0.0
    %454 = vmatpush1.msra.mxu0 0.0
    %455 = vmatprep.mubr.f32.mxu0 0.0
    %v456 = vand.u32 %v100, 4294901760
    %v457 = vsub.f32 %v100, %v456
    %458 = vmatmul.mubr.f32.gmra.mrb[0].mxu0 %v457
    %v459 = vpop.f32.mrb[0].mxu0
    %v460 = vadd.f32 %v356, %v459
    %v461 = vpop.f32.mrb[0].mxu0
    %462 = vdwg.mxu0
    %463 = vmatprep.subr.mxu0 0.0
    %v464 = vand.u32 %v101, 4294901760
    %465 = vmatpush1.msra.mxu0 %v464
    %466 = vmatprep.subr.mxu0 0.0
    %v467 = vand.u32 %v102, 4294901760
    %468 = vmatpush1.msra.mxu0 %v467
    %469 = vmatprep.subr.mxu0 0.0
    %v470 = vand.u32 %v103, 4294901760
    %471 = vmatpush1.msra.mxu0 %v470
    %472 = vmatprep.subr.mxu0 0.0
    %v473 = vand.u32 %v104, 4294901760
    %474 = vmatpush1.msra.mxu0 %v473
    %475 = vmatprep.subr.mxu0 0.0
    %v476 = vand.u32 %v105, 4294901760
    %477 = vmatpush1.msra.mxu0 %v476
    %478 = vmatprep.subr.mxu0 0.0
    %v479 = vand.u32 %v106, 4294901760
    %480 = vmatpush1.msra.mxu0 %v479
    %481 = vmatprep.subr.mxu0 0.0
    %v482 = vand.u32 %v107, 4294901760
    %483 = vmatpush1.msra.mxu0 %v482
    %484 = vmatprep.subr.mxu0 0.0
    %v485 = vand.u32 %v108, 4294901760
    %486 = vmatpush1.msra.mxu0 %v485
    %487 = vmatprep.subr.mxu0 0.0
    %v488 = vand.u32 %v109, 4294901760
    %489 = vmatpush1.msra.mxu0 %v488
    %490 = vmatprep.subr.mxu0 0.0
    %v491 = vand.u32 %v110, 4294901760
    %492 = vmatpush1.msra.mxu0 %v491
    %493 = vmatprep.subr.mxu0 0.0
    %v494 = vand.u32 %v111, 4294901760
    %495 = vmatpush1.msra.mxu0 %v494
    %496 = vmatprep.subr.mxu0 0.0
    %v497 = vand.u32 %v112, 4294901760
    %498 = vmatpush1.msra.mxu0 %v497
    %499 = vmatprep.subr.mxu0 0.0
    %v500 = vand.u32 %v113, 4294901760
    %501 = vmatpush1.msra.mxu0 %v500
    %502 = vmatprep.subr.mxu0 0.0
    %v503 = vand.u32 %v114, 4294901760
    %504 = vmatpush1.msra.mxu0 %v503
    %505 = vmatprep.subr.mxu0 0.0
    %v506 = vand.u32 %v115, 4294901760
    %507 = vmatpush1.msra.mxu0 %v506
    %508 = vmatprep.subr.mxu0 0.0
    %v509 = vand.u32 %v116, 4294901760
    %510 = vmatpush1.msra.mxu0 %v509
    %511 = vmatprep.subr.mxu0 0.0
    %512 = vmatpush1.msra.mxu0 0.0
    %513 = vmatprep.subr.mxu0 0.0
    %514 = vmatpush1.msra.mxu0 0.0
    %515 = vmatprep.subr.mxu0 0.0
    %516 = vmatpush1.msra.mxu0 0.0
    %517 = vmatprep.subr.mxu0 0.0
    %518 = vmatpush1.msra.mxu0 0.0
    %519 = vmatprep.subr.mxu0 0.0
    %520 = vmatpush1.msra.mxu0 0.0
    %521 = vmatprep.subr.mxu0 0.0
    %522 = vmatpush1.msra.mxu0 0.0
    %523 = vmatprep.subr.mxu0 0.0
    %524 = vmatpush1.msra.mxu0 0.0
    %525 = vmatprep.subr.mxu0 0.0
    %526 = vmatpush1.msra.mxu0 0.0
    %527 = vmatprep.subr.mxu0 0.0
    %528 = vmatpush1.msra.mxu0 0.0
    %529 = vmatprep.subr.mxu0 0.0
    %530 = vmatpush1.msra.mxu0 0.0
    %531 = vmatprep.subr.mxu0 0.0
    %532 = vmatpush1.msra.mxu0 0.0
    %533 = vmatprep.subr.mxu0 0.0
    %534 = vmatpush1.msra.mxu0 0.0
    %535 = vmatprep.subr.mxu0 0.0
    %536 = vmatpush1.msra.mxu0 0.0
    %537 = vmatprep.subr.mxu0 0.0
    %538 = vmatpush1.msra.mxu0 0.0
    %539 = vmatprep.subr.mxu0 0.0
    %540 = vmatpush1.msra.mxu0 0.0
    %541 = vmatprep.subr.mxu0 0.0
    %542 = vmatpush1.msra.mxu0 0.0
    %543 = vmatprep.mubr.f32.mxu0 0.0
    %v544 = vand.u32 %v100, 4294901760
    %v545 = vsub.f32 %v100, %v544
    %v546 = vand.u32 %v545, 4294901760
    %547 = vmatmul.mubr.f32.gmra.mrb[0].mxu0 %v546
    %v548 = vpop.f32.mrb[0].mxu0
    %v549 = vadd.f32 %v460, %v548
    %v550 = vpop.f32.mrb[0].mxu0
    %551 = vdwg.mxu0
    %552 = vmatprep.subr.mxu0 0.0
    %v553 = vand.u32 %v101, 4294901760
    %v554 = vsub.f32 %v101, %v553
    %v555 = vand.u32 %v554, 4294901760
    %556 = vmatpush1.msra.mxu0 %v555
    %557 = vmatprep.subr.mxu0 0.0
    %v558 = vand.u32 %v102, 4294901760
    %v559 = vsub.f32 %v102, %v558
    %v560 = vand.u32 %v559, 4294901760
    %561 = vmatpush1.msra.mxu0 %v560
    %562 = vmatprep.subr.mxu0 0.0
    %v563 = vand.u32 %v103, 4294901760
    %v564 = vsub.f32 %v103, %v563
    %v565 = vand.u32 %v564, 4294901760
    %566 = vmatpush1.msra.mxu0 %v565
    %567 = vmatprep.subr.mxu0 0.0
    %v568 = vand.u32 %v104, 4294901760
    %v569 = vsub.f32 %v104, %v568
    %v570 = vand.u32 %v569, 4294901760
    %571 = vmatpush1.msra.mxu0 %v570
    %572 = vmatprep.subr.mxu0 0.0
    %v573 = vand.u32 %v105, 4294901760
    %v574 = vsub.f32 %v105, %v573
    %v575 = vand.u32 %v574, 4294901760
    %576 = vmatpush1.msra.mxu0 %v575
    %577 = vmatprep.subr.mxu0 0.0
    %v578 = vand.u32 %v106, 4294901760
    %v579 = vsub.f32 %v106, %v578
    %v580 = vand.u32 %v579, 4294901760
    %581 = vmatpush1.msra.mxu0 %v580
    %582 = vmatprep.subr.mxu0 0.0
    %v583 = vand.u32 %v107, 4294901760
    %v584 = vsub.f32 %v107, %v583
    %v585 = vand.u32 %v584, 4294901760
    %586 = vmatpush1.msra.mxu0 %v585
    %587 = vmatprep.subr.mxu0 0.0
    %v588 = vand.u32 %v108, 4294901760
    %v589 = vsub.f32 %v108, %v588
    %v590 = vand.u32 %v589, 4294901760
    %591 = vmatpush1.msra.mxu0 %v590
    %592 = vmatprep.subr.mxu0 0.0
    %v593 = vand.u32 %v109, 4294901760
    %v594 = vsub.f32 %v109, %v593
    %v595 = vand.u32 %v594, 4294901760
    %596 = vmatpush1.msra.mxu0 %v595
    %597 = vmatprep.subr.mxu0 0.0
    %v598 = vand.u32 %v110, 4294901760
    %v599 = vsub.f32 %v110, %v598
    %v600 = vand.u32 %v599, 4294901760
    %601 = vmatpush1.msra.mxu0 %v600
    %602 = vmatprep.subr.mxu0 0.0
    %v603 = vand.u32 %v111, 4294901760
    %v604 = vsub.f32 %v111, %v603
    %v605 = vand.u32 %v604, 4294901760
    %606 = vmatpush1.msra.mxu0 %v605
    %607 = vmatprep.subr.mxu0 0.0
    %v608 = vand.u32 %v112, 4294901760
    %v609 = vsub.f32 %v112, %v608
    %v610 = vand.u32 %v609, 4294901760
    %611 = vmatpush1.msra.mxu0 %v610
    %612 = vmatprep.subr.mxu0 0.0
    %v613 = vand.u32 %v113, 4294901760
    %v614 = vsub.f32 %v113, %v613
    %v615 = vand.u32 %v614, 4294901760
    %616 = vmatpush1.msra.mxu0 %v615
    %617 = vmatprep.subr.mxu0 0.0
    %v618 = vand.u32 %v114, 4294901760
    %v619 = vsub.f32 %v114, %v618
    %v620 = vand.u32 %v619, 4294901760
    %621 = vmatpush1.msra.mxu0 %v620
    %622 = vmatprep.subr.mxu0 0.0
    %v623 = vand.u32 %v115, 4294901760
    %v624 = vsub.f32 %v115, %v623
    %v625 = vand.u32 %v624, 4294901760
    %626 = vmatpush1.msra.mxu0 %v625
    %627 = vmatprep.subr.mxu0 0.0
    %v628 = vand.u32 %v116, 4294901760
    %v629 = vsub.f32 %v116, %v628
    %v630 = vand.u32 %v629, 4294901760
    %631 = vmatpush1.msra.mxu0 %v630
    %632 = vmatprep.subr.mxu0 0.0
    %633 = vmatpush1.msra.mxu0 0.0
    %634 = vmatprep.subr.mxu0 0.0
    %635 = vmatpush1.msra.mxu0 0.0
    %636 = vmatprep.subr.mxu0 0.0
    %637 = vmatpush1.msra.mxu0 0.0
    %638 = vmatprep.subr.mxu0 0.0
    %639 = vmatpush1.msra.mxu0 0.0
    %640 = vmatprep.subr.mxu0 0.0
    %641 = vmatpush1.msra.mxu0 0.0
    %642 = vmatprep.subr.mxu0 0.0
    %643 = vmatpush1.msra.mxu0 0.0
    %644 = vmatprep.subr.mxu0 0.0
    %645 = vmatpush1.msra.mxu0 0.0
    %646 = vmatprep.subr.mxu0 0.0
    %647 = vmatpush1.msra.mxu0 0.0
    %648 = vmatprep.subr.mxu0 0.0
    %649 = vmatpush1.msra.mxu0 0.0
    %650 = vmatprep.subr.mxu0 0.0
    %651 = vmatpush1.msra.mxu0 0.0
    %652 = vmatprep.subr.mxu0 0.0
    %653 = vmatpush1.msra.mxu0 0.0
    %654 = vmatprep.subr.mxu0 0.0
    %655 = vmatpush1.msra.mxu0 0.0
    %656 = vmatprep.subr.mxu0 0.0
    %657 = vmatpush1.msra.mxu0 0.0
    %658 = vmatprep.subr.mxu0 0.0
    %659 = vmatpush1.msra.mxu0 0.0
    %660 = vmatprep.subr.mxu0 0.0
    %661 = vmatpush1.msra.mxu0 0.0
    %662 = vmatprep.subr.mxu0 0.0
    %663 = vmatpush1.msra.mxu0 0.0
    %664 = vmatprep.mubr.f32.mxu0 0.0
    %v665 = vand.u32 %v100, 4294901760
    %666 = vmatmul.mubr.f32.gmra.mrb[0].mxu0 %v665
    %v667 = vpop.f32.mrb[0].mxu0
    %v668 = vadd.f32 %v549, %v667
    %v669 = vpop.f32.mrb[0].mxu0
    %670 = vdwg.mxu0
    %671 = vmatprep.subr.mxu0 0.0
    %v672 = vand.u32 %v101, 4294901760
    %673 = vmatpush1.msra.mxu0 %v672
    %674 = vmatprep.subr.mxu0 0.0
    %v675 = vand.u32 %v102, 4294901760
    %676 = vmatpush1.msra.mxu0 %v675
    %677 = vmatprep.subr.mxu0 0.0
    %v678 = vand.u32 %v103, 4294901760
    %679 = vmatpush1.msra.mxu0 %v678
    %680 = vmatprep.subr.mxu0 0.0
    %v681 = vand.u32 %v104, 4294901760
    %682 = vmatpush1.msra.mxu0 %v681
    %683 = vmatprep.subr.mxu0 0.0
    %v684 = vand.u32 %v105, 4294901760
    %685 = vmatpush1.msra.mxu0 %v684
    %686 = vmatprep.subr.mxu0 0.0
    %v687 = vand.u32 %v106, 4294901760
    %688 = vmatpush1.msra.mxu0 %v687
    %689 = vmatprep.subr.mxu0 0.0
    %v690 = vand.u32 %v107, 4294901760
    %691 = vmatpush1.msra.mxu0 %v690
    %692 = vmatprep.subr.mxu0 0.0
    %v693 = vand.u32 %v108, 4294901760
    %694 = vmatpush1.msra.mxu0 %v693
    %695 = vmatprep.subr.mxu0 0.0
    %v696 = vand.u32 %v109, 4294901760
    %697 = vmatpush1.msra.mxu0 %v696
    %698 = vmatprep.subr.mxu0 0.0
    %v699 = vand.u32 %v110, 4294901760
    %700 = vmatpush1.msra.mxu0 %v699
    %701 = vmatprep.subr.mxu0 0.0
    %v702 = vand.u32 %v111, 4294901760
    %703 = vmatpush1.msra.mxu0 %v702
    %704 = vmatprep.subr.mxu0 0.0
    %v705 = vand.u32 %v112, 4294901760
    %706 = vmatpush1.msra.mxu0 %v705
    %707 = vmatprep.subr.mxu0 0.0
    %v708 = vand.u32 %v113, 4294901760
    %709 = vmatpush1.msra.mxu0 %v708
    %710 = vmatprep.subr.mxu0 0.0
    %v711 = vand.u32 %v114, 4294901760
    %712 = vmatpush1.msra.mxu0 %v711
    %713 = vmatprep.subr.mxu0 0.0
    %v714 = vand.u32 %v115, 4294901760
    %715 = vmatpush1.msra.mxu0 %v714
    %716 = vmatprep.subr.mxu0 0.0
    %v717 = vand.u32 %v116, 4294901760
    %718 = vmatpush1.msra.mxu0 %v717
    %719 = vmatprep.subr.mxu0 0.0
    %720 = vmatpush1.msra.mxu0 0.0
    %721 = vmatprep.subr.mxu0 0.0
    %722 = vmatpush1.msra.mxu0 0.0
    %723 = vmatprep.subr.mxu0 0.0
    %724 = vmatpush1.msra.mxu0 0.0
    %725 = vmatprep.subr.mxu0 0.0
    %726 = vmatpush1.msra.mxu0 0.0
    %727 = vmatprep.subr.mxu0 0.0
    %728 = vmatpush1.msra.mxu0 0.0
    %729 = vmatprep.subr.mxu0 0.0
    %730 = vmatpush1.msra.mxu0 0.0
    %731 = vmatprep.subr.mxu0 0.0
    %732 = vmatpush1.msra.mxu0 0.0
    %733 = vmatprep.subr.mxu0 0.0
    %734 = vmatpush1.msra.mxu0 0.0
    %735 = vmatprep.subr.mxu0 0.0
    %736 = vmatpush1.msra.mxu0 0.0
    %737 = vmatprep.subr.mxu0 0.0
    %738 = vmatpush1.msra.mxu0 0.0
    %739 = vmatprep.subr.mxu0 0.0
    %740 = vmatpush1.msra.mxu0 0.0
    %741 = vmatprep.subr.mxu0 0.0
    %742 = vmatpush1.msra.mxu0 0.0
    %743 = vmatprep.subr.mxu0 0.0
    %744 = vmatpush1.msra.mxu0 0.0
    %745 = vmatprep.subr.mxu0 0.0
    %746 = vmatpush1.msra.mxu0 0.0
    %747 = vmatprep.subr.mxu0 0.0
    %748 = vmatpush1.msra.mxu0 0.0
    %749 = vmatprep.subr.mxu0 0.0
    %750 = vmatpush1.msra.mxu0 0.0
    %751 = vmatprep.mubr.f32.mxu0 0.0
    %v752 = vand.u32 %v100, 4294901760
    %753 = vmatmul.mubr.f32.gmra.mrb[0].mxu0 %v752
    %v754 = vpop.f32.mrb[0].mxu0
    %v755 = vadd.f32 %v668, %v754
    %v756 = vpop.f32.mrb[0].mxu0
    %757 = vdwg.mxu0
    %758 = vmatprep.subr.mxu0 0.0
    %v759 = vand.u32 %v84, 4294901760
    %760 = vmatpush1.msra.mxu0 %v759
    %761 = vmatprep.subr.mxu0 0.0
    %v762 = vand.u32 %v85, 4294901760
    %763 = vmatpush1.msra.mxu0 %v762
    %764 = vmatprep.subr.mxu0 0.0
    %v765 = vand.u32 %v86, 4294901760
    %766 = vmatpush1.msra.mxu0 %v765
    %767 = vmatprep.subr.mxu0 0.0
    %v768 = vand.u32 %v87, 4294901760
    %769 = vmatpush1.msra.mxu0 %v768
    %770 = vmatprep.subr.mxu0 0.0
    %v771 = vand.u32 %v88, 4294901760
    %772 = vmatpush1.msra.mxu0 %v771
    %773 = vmatprep.subr.mxu0 0.0
    %v774 = vand.u32 %v89, 4294901760
    %775 = vmatpush1.msra.mxu0 %v774
    %776 = vmatprep.subr.mxu0 0.0
    %v777 = vand.u32 %v90, 4294901760
    %778 = vmatpush1.msra.mxu0 %v777
    %779 = vmatprep.subr.mxu0 0.0
    %v780 = vand.u32 %v91, 4294901760
    %781 = vmatpush1.msra.mxu0 %v780
    %782 = vmatprep.subr.mxu0 0.0
    %v783 = vand.u32 %v92, 4294901760
    %784 = vmatpush1.msra.mxu0 %v783
    %785 = vmatprep.subr.mxu0 0.0
    %v786 = vand.u32 %v93, 4294901760
    %787 = vmatpush1.msra.mxu0 %v786
    %788 = vmatprep.subr.mxu0 0.0
    %v789 = vand.u32 %v94, 4294901760
    %790 = vmatpush1.msra.mxu0 %v789
    %791 = vmatprep.subr.mxu0 0.0
    %v792 = vand.u32 %v95, 4294901760
    %793 = vmatpush1.msra.mxu0 %v792
    %794 = vmatprep.subr.mxu0 0.0
    %v795 = vand.u32 %v96, 4294901760
    %796 = vmatpush1.msra.mxu0 %v795
    %797 = vmatprep.subr.mxu0 0.0
    %v798 = vand.u32 %v97, 4294901760
    %799 = vmatpush1.msra.mxu0 %v798
    %800 = vmatprep.subr.mxu0 0.0
    %v801 = vand.u32 %v98, 4294901760
    %802 = vmatpush1.msra.mxu0 %v801
    %803 = vmatprep.subr.mxu0 0.0
    %v804 = vand.u32 %v99, 4294901760
    %805 = vmatpush1.msra.mxu0 %v804
    %806 = vmatprep.subr.mxu0 0.0
    %807 = vmatpush1.msra.mxu0 0.0
    %808 = vmatprep.subr.mxu0 0.0
    %809 = vmatpush1.msra.mxu0 0.0
    %810 = vmatprep.subr.mxu0 0.0
    %811 = vmatpush1.msra.mxu0 0.0
    %812 = vmatprep.subr.mxu0 0.0
    %813 = vmatpush1.msra.mxu0 0.0
    %814 = vmatprep.subr.mxu0 0.0
    %815 = vmatpush1.msra.mxu0 0.0
    %816 = vmatprep.subr.mxu0 0.0
    %817 = vmatpush1.msra.mxu0 0.0
    %818 = vmatprep.subr.mxu0 0.0
    %819 = vmatpush1.msra.mxu0 0.0
    %820 = vmatprep.subr.mxu0 0.0
    %821 = vmatpush1.msra.mxu0 0.0
    %822 = vmatprep.subr.mxu0 0.0
    %823 = vmatpush1.msra.mxu0 0.0
    %824 = vmatprep.subr.mxu0 0.0
    %825 = vmatpush1.msra.mxu0 0.0
    %826 = vmatprep.subr.mxu0 0.0
    %827 = vmatpush1.msra.mxu0 0.0
    %828 = vmatprep.subr.mxu0 0.0
    %829 = vmatpush1.msra.mxu0 0.0
    %830 = vmatprep.subr.mxu0 0.0
    %831 = vmatpush1.msra.mxu0 0.0
    %832 = vmatprep.subr.mxu0 0.0
    %833 = vmatpush1.msra.mxu0 0.0
    %834 = vmatprep.subr.mxu0 0.0
    %835 = vmatpush1.msra.mxu0 0.0
    %836 = vmatprep.subr.mxu0 0.0
    %837 = vmatpush1.msra.mxu0 0.0
    %838 = vmatprep.mubr.f32.mxu0 0.0
    %v839 = vand.u32 %v83, 4294901760
    %v840 = vsub.f32 %v83, %v839
    %v841 = vand.u32 %v840, 4294901760
    %v842 = vsub.f32 %v840, %v841
    %v843 = vand.u32 %v842, 4294901760
    %844 = vmatmul.mubr.f32.gmra.mrb[0].mxu0 %v843
    %v845 = vpop.f32.mrb[0].mxu0
    %v846 = vadd.f32 %v755, %v845
    %v847 = vpop.f32.mrb[0].mxu0
    %848 = vdwg.mxu0
    %849 = vmatprep.subr.mxu0 0.0
    %v850 = vand.u32 %v84, 4294901760
    %v851 = vsub.f32 %v84, %v850
    %v852 = vand.u32 %v851, 4294901760
    %v853 = vsub.f32 %v851, %v852
    %v854 = vand.u32 %v853, 4294901760
    %855 = vmatpush1.msra.mxu0 %v854
    %856 = vmatprep.subr.mxu0 0.0
    %v857 = vand.u32 %v85, 4294901760
    %v858 = vsub.f32 %v85, %v857
    %v859 = vand.u32 %v858, 4294901760
    %v860 = vsub.f32 %v858, %v859
    %v861 = vand.u32 %v860, 4294901760
    %862 = vmatpush1.msra.mxu0 %v861
    %863 = vmatprep.subr.mxu0 0.0
    %v864 = vand.u32 %v86, 4294901760
    %v865 = vsub.f32 %v86, %v864
    %v866 = vand.u32 %v865, 4294901760
    %v867 = vsub.f32 %v865, %v866
    %v868 = vand.u32 %v867, 4294901760
    %869 = vmatpush1.msra.mxu0 %v868
    %870 = vmatprep.subr.mxu0 0.0
    %v871 = vand.u32 %v87, 4294901760
    %v872 = vsub.f32 %v87, %v871
    %v873 = vand.u32 %v872, 4294901760
    %v874 = vsub.f32 %v872, %v873
    %v875 = vand.u32 %v874, 4294901760
    %876 = vmatpush1.msra.mxu0 %v875
    %877 = vmatprep.subr.mxu0 0.0
    %v878 = vand.u32 %v88, 4294901760
    %v879 = vsub.f32 %v88, %v878
    %v880 = vand.u32 %v879, 4294901760
    %v881 = vsub.f32 %v879, %v880
    %v882 = vand.u32 %v881, 4294901760
    %883 = vmatpush1.msra.mxu0 %v882
    %884 = vmatprep.subr.mxu0 0.0
    %v885 = vand.u32 %v89, 4294901760
    %v886 = vsub.f32 %v89, %v885
    %v887 = vand.u32 %v886, 4294901760
    %v888 = vsub.f32 %v886, %v887
    %v889 = vand.u32 %v888, 4294901760
    %890 = vmatpush1.msra.mxu0 %v889
    %891 = vmatprep.subr.mxu0 0.0
    %v892 = vand.u32 %v90, 4294901760
    %v893 = vsub.f32 %v90, %v892
    %v894 = vand.u32 %v893, 4294901760
    %v895 = vsub.f32 %v893, %v894
    %v896 = vand.u32 %v895, 4294901760
    %897 = vmatpush1.msra.mxu0 %v896
    %898 = vmatprep.subr.mxu0 0.0
    %v899 = vand.u32 %v91, 4294901760
    %v900 = vsub.f32 %v91, %v899
    %v901 = vand.u32 %v900, 4294901760
    %v902 = vsub.f32 %v900, %v901
    %v903 = vand.u32 %v902, 4294901760
    %904 = vmatpush1.msra.mxu0 %v903
    %905 = vmatprep.subr.mxu0 0.0
    %v906 = vand.u32 %v92, 4294901760
    %v907 = vsub.f32 %v92, %v906
    %v908 = vand.u32 %v907, 4294901760
    %v909 = vsub.f32 %v907, %v908
    %v910 = vand.u32 %v909, 4294901760
    %911 = vmatpush1.msra.mxu0 %v910
    %912 = vmatprep.subr.mxu0 0.0
    %v913 = vand.u32 %v93, 4294901760
    %v914 = vsub.f32 %v93, %v913
    %v915 = vand.u32 %v914, 4294901760
    %v916 = vsub.f32 %v914, %v915
    %v917 = vand.u32 %v916, 4294901760
    %918 = vmatpush1.msra.mxu0 %v917
    %919 = vmatprep.subr.mxu0 0.0
    %v920 = vand.u32 %v94, 4294901760
    %v921 = vsub.f32 %v94, %v920
    %v922 = vand.u32 %v921, 4294901760
    %v923 = vsub.f32 %v921, %v922
    %v924 = vand.u32 %v923, 4294901760
    %925 = vmatpush1.msra.mxu0 %v924
    %926 = vmatprep.subr.mxu0 0.0
    %v927 = vand.u32 %v95, 4294901760
    %v928 = vsub.f32 %v95, %v927
    %v929 = vand.u32 %v928, 4294901760
    %v930 = vsub.f32 %v928, %v929
    %v931 = vand.u32 %v930, 4294901760
    %932 = vmatpush1.msra.mxu0 %v931
    %933 = vmatprep.subr.mxu0 0.0
    %v934 = vand.u32 %v96, 4294901760
    %v935 = vsub.f32 %v96, %v934
    %v936 = vand.u32 %v935, 4294901760
    %v937 = vsub.f32 %v935, %v936
    %v938 = vand.u32 %v937, 4294901760
    %939 = vmatpush1.msra.mxu0 %v938
    %940 = vmatprep.subr.mxu0 0.0
    %v941 = vand.u32 %v97, 4294901760
    %v942 = vsub.f32 %v97, %v941
    %v943 = vand.u32 %v942, 4294901760
    %v944 = vsub.f32 %v942, %v943
    %v945 = vand.u32 %v944, 4294901760
    %946 = vmatpush1.msra.mxu0 %v945
    %947 = vmatprep.subr.mxu0 0.0
    %v948 = vand.u32 %v98, 4294901760
    %v949 = vsub.f32 %v98, %v948
    %v950 = vand.u32 %v949, 4294901760
    %v951 = vsub.f32 %v949, %v950
    %v952 = vand.u32 %v951, 4294901760
    %953 = vmatpush1.msra.mxu0 %v952
    %954 = vmatprep.subr.mxu0 0.0
    %v955 = vand.u32 %v99, 4294901760
    %v956 = vsub.f32 %v99, %v955
    %v957 = vand.u32 %v956, 4294901760
    %v958 = vsub.f32 %v956, %v957
    %v959 = vand.u32 %v958, 4294901760
    %960 = vmatpush1.msra.mxu0 %v959
    %961 = vmatprep.subr.mxu0 0.0
    %962 = vmatpush1.msra.mxu0 0.0
    %963 = vmatprep.subr.mxu0 0.0
    %964 = vmatpush1.msra.mxu0 0.0
    %965 = vmatprep.subr.mxu0 0.0
    %966 = vmatpush1.msra.mxu0 0.0
    %967 = vmatprep.subr.mxu0 0.0
    %968 = vmatpush1.msra.mxu0 0.0
    %969 = vmatprep.subr.mxu0 0.0
    %970 = vmatpush1.msra.mxu0 0.0
    %971 = vmatprep.subr.mxu0 0.0
    %972 = vmatpush1.msra.mxu0 0.0
    %973 = vmatprep.subr.mxu0 0.0
    %974 = vmatpush1.msra.mxu0 0.0
    %975 = vmatprep.subr.mxu0 0.0
    %976 = vmatpush1.msra.mxu0 0.0
    %977 = vmatprep.subr.mxu0 0.0
    %978 = vmatpush1.msra.mxu0 0.0
    %979 = vmatprep.subr.mxu0 0.0
    %980 = vmatpush1.msra.mxu0 0.0
    %981 = vmatprep.subr.mxu0 0.0
    %982 = vmatpush1.msra.mxu0 0.0
    %983 = vmatprep.subr.mxu0 0.0
    %984 = vmatpush1.msra.mxu0 0.0
    %985 = vmatprep.subr.mxu0 0.0
    %986 = vmatpush1.msra.mxu0 0.0
    %987 = vmatprep.subr.mxu0 0.0
    %988 = vmatpush1.msra.mxu0 0.0
    %989 = vmatprep.subr.mxu0 0.0
    %990 = vmatpush1.msra.mxu0 0.0
    %991 = vmatprep.subr.mxu0 0.0
    %992 = vmatpush1.msra.mxu0 0.0
    %993 = vmatprep.mubr.f32.mxu0 0.0
    %v994 = vand.u32 %v83, 4294901760
    %995 = vmatmul.mubr.f32.gmra.mrb[0].mxu0 %v994
    %v996 = vpop.f32.mrb[0].mxu0
    %v997 = vadd.f32 %v846, %v996
    %v998 = vpop.f32.mrb[0].mxu0
    %999 = vdwg.mxu0
    %1000 = vmatprep.subr.mxu0 0.0
    %v1001 = vand.u32 %v84, 4294901760
    %v1002 = vsub.f32 %v84, %v1001
    %1003 = vmatpush1.msra.mxu0 %v1002
    %1004 = vmatprep.subr.mxu0 0.0
    %v1005 = vand.u32 %v85, 4294901760
    %v1006 = vsub.f32 %v85, %v1005
    %1007 = vmatpush1.msra.mxu0 %v1006
    %1008 = vmatprep.subr.mxu0 0.0
    %v1009 = vand.u32 %v86, 4294901760
    %v1010 = vsub.f32 %v86, %v1009
    %1011 = vmatpush1.msra.mxu0 %v1010
    %1012 = vmatprep.subr.mxu0 0.0
    %v1013 = vand.u32 %v87, 4294901760
    %v1014 = vsub.f32 %v87, %v1013
    %1015 = vmatpush1.msra.mxu0 %v1014
    %1016 = vmatprep.subr.mxu0 0.0
    %v1017 = vand.u32 %v88, 4294901760
    %v1018 = vsub.f32 %v88, %v1017
    %1019 = vmatpush1.msra.mxu0 %v1018
    %1020 = vmatprep.subr.mxu0 0.0
    %v1021 = vand.u32 %v89, 4294901760
    %v1022 = vsub.f32 %v89, %v1021
    %1023 = vmatpush1.msra.mxu0 %v1022
    %1024 = vmatprep.subr.mxu0 0.0
    %v1025 = vand.u32 %v90, 4294901760
    %v1026 = vsub.f32 %v90, %v1025
    %1027 = vmatpush1.msra.mxu0 %v1026
    %1028 = vmatprep.subr.mxu0 0.0
    %v1029 = vand.u32 %v91, 4294901760
    %v1030 = vsub.f32 %v91, %v1029
    %1031 = vmatpush1.msra.mxu0 %v1030
    %1032 = vmatprep.subr.mxu0 0.0
    %v1033 = vand.u32 %v92, 4294901760
    %v1034 = vsub.f32 %v92, %v1033
    %1035 = vmatpush1.msra.mxu0 %v1034
    %1036 = vmatprep.subr.mxu0 0.0
    %v1037 = vand.u32 %v93, 4294901760
    %v1038 = vsub.f32 %v93, %v1037
    %1039 = vmatpush1.msra.mxu0 %v1038
    %1040 = vmatprep.subr.mxu0 0.0
    %v1041 = vand.u32 %v94, 4294901760
    %v1042 = vsub.f32 %v94, %v1041
    %1043 = vmatpush1.msra.mxu0 %v1042
    %1044 = vmatprep.subr.mxu0 0.0
    %v1045 = vand.u32 %v95, 4294901760
    %v1046 = vsub.f32 %v95, %v1045
    %1047 = vmatpush1.msra.mxu0 %v1046
    %1048 = vmatprep.subr.mxu0 0.0
    %v1049 = vand.u32 %v96, 4294901760
    %v1050 = vsub.f32 %v96, %v1049
    %1051 = vmatpush1.msra.mxu0 %v1050
    %1052 = vmatprep.subr.mxu0 0.0
    %v1053 = vand.u32 %v97, 4294901760
    %v1054 = vsub.f32 %v97, %v1053
    %1055 = vmatpush1.msra.mxu0 %v1054
    %1056 = vmatprep.subr.mxu0 0.0
    %v1057 = vand.u32 %v98, 4294901760
    %v1058 = vsub.f32 %v98, %v1057
    %1059 = vmatpush1.msra.mxu0 %v1058
    %1060 = vmatprep.subr.mxu0 0.0
    %v1061 = vand.u32 %v99, 4294901760
    %v1062 = vsub.f32 %v99, %v1061
    %1063 = vmatpush1.msra.mxu0 %v1062
    %1064 = vmatprep.subr.mxu0 0.0
    %1065 = vmatpush1.msra.mxu0 0.0
    %1066 = vmatprep.subr.mxu0 0.0
    %1067 = vmatpush1.msra.mxu0 0.0
    %1068 = vmatprep.subr.mxu0 0.0
    %1069 = vmatpush1.msra.mxu0 0.0
    %1070 = vmatprep.subr.mxu0 0.0
    %1071 = vmatpush1.msra.mxu0 0.0
    %1072 = vmatprep.subr.mxu0 0.0
    %1073 = vmatpush1.msra.mxu0 0.0
    %1074 = vmatprep.subr.mxu0 0.0
    %1075 = vmatpush1.msra.mxu0 0.0
    %1076 = vmatprep.subr.mxu0 0.0
    %1077 = vmatpush1.msra.mxu0 0.0
    %1078 = vmatprep.subr.mxu0 0.0
    %1079 = vmatpush1.msra.mxu0 0.0
    %1080 = vmatprep.subr.mxu0 0.0
    %1081 = vmatpush1.msra.mxu0 0.0
    %1082 = vmatprep.subr.mxu0 0.0
    %1083 = vmatpush1.msra.mxu0 0.0
    %1084 = vmatprep.subr.mxu0 0.0
    %1085 = vmatpush1.msra.mxu0 0.0
    %1086 = vmatprep.subr.mxu0 0.0
    %1087 = vmatpush1.msra.mxu0 0.0
    %1088 = vmatprep.subr.mxu0 0.0
    %1089 = vmatpush1.msra.mxu0 0.0
    %1090 = vmatprep.subr.mxu0 0.0
    %1091 = vmatpush1.msra.mxu0 0.0
    %1092 = vmatprep.subr.mxu0 0.0
    %1093 = vmatpush1.msra.mxu0 0.0
    %1094 = vmatprep.subr.mxu0 0.0
    %1095 = vmatpush1.msra.mxu0 0.0
    %1096 = vmatprep.mubr.f32.mxu0 0.0
    %v1097 = vand.u32 %v83, 4294901760
    %v1098 = vsub.f32 %v83, %v1097
    %1099 = vmatmul.mubr.f32.gmra.mrb[0].mxu0 %v1098
    %v1100 = vpop.f32.mrb[0].mxu0
    %v1101 = vadd.f32 %v997, %v1100
    %v1102 = vpop.f32.mrb[0].mxu0
    %1103 = vdwg.mxu0
    %1104 = vmatprep.subr.mxu0 0.0
    %v1105 = vand.u32 %v84, 4294901760
    %1106 = vmatpush1.msra.mxu0 %v1105
    %1107 = vmatprep.subr.mxu0 0.0
    %v1108 = vand.u32 %v85, 4294901760
    %1109 = vmatpush1.msra.mxu0 %v1108
    %1110 = vmatprep.subr.mxu0 0.0
    %v1111 = vand.u32 %v86, 4294901760
    %1112 = vmatpush1.msra.mxu0 %v1111
    %1113 = vmatprep.subr.mxu0 0.0
    %v1114 = vand.u32 %v87, 4294901760
    %1115 = vmatpush1.msra.mxu0 %v1114
    %1116 = vmatprep.subr.mxu0 0.0
    %v1117 = vand.u32 %v88, 4294901760
    %1118 = vmatpush1.msra.mxu0 %v1117
    %1119 = vmatprep.subr.mxu0 0.0
    %v1120 = vand.u32 %v89, 4294901760
    %1121 = vmatpush1.msra.mxu0 %v1120
    %1122 = vmatprep.subr.mxu0 0.0
    %v1123 = vand.u32 %v90, 4294901760
    %1124 = vmatpush1.msra.mxu0 %v1123
    %1125 = vmatprep.subr.mxu0 0.0
    %v1126 = vand.u32 %v91, 4294901760
    %1127 = vmatpush1.msra.mxu0 %v1126
    %1128 = vmatprep.subr.mxu0 0.0
    %v1129 = vand.u32 %v92, 4294901760
    %1130 = vmatpush1.msra.mxu0 %v1129
    %1131 = vmatprep.subr.mxu0 0.0
    %v1132 = vand.u32 %v93, 4294901760
    %1133 = vmatpush1.msra.mxu0 %v1132
    %1134 = vmatprep.subr.mxu0 0.0
    %v1135 = vand.u32 %v94, 4294901760
    %1136 = vmatpush1.msra.mxu0 %v1135
    %1137 = vmatprep.subr.mxu0 0.0
    %v1138 = vand.u32 %v95, 4294901760
    %1139 = vmatpush1.msra.mxu0 %v1138
    %1140 = vmatprep.subr.mxu0 0.0
    %v1141 = vand.u32 %v96, 4294901760
    %1142 = vmatpush1.msra.mxu0 %v1141
    %1143 = vmatprep.subr.mxu0 0.0
    %v1144 = vand.u32 %v97, 4294901760
    %1145 = vmatpush1.msra.mxu0 %v1144
    %1146 = vmatprep.subr.mxu0 0.0
    %v1147 = vand.u32 %v98, 4294901760
    %1148 = vmatpush1.msra.mxu0 %v1147
    %1149 = vmatprep.subr.mxu0 0.0
    %v1150 = vand.u32 %v99, 4294901760
    %1151 = vmatpush1.msra.mxu0 %v1150
    %1152 = vmatprep.subr.mxu0 0.0
    %1153 = vmatpush1.msra.mxu0 0.0
    %1154 = vmatprep.subr.mxu0 0.0
    %1155 = vmatpush1.msra.mxu0 0.0
    %1156 = vmatprep.subr.mxu0 0.0
    %1157 = vmatpush1.msra.mxu0 0.0
    %1158 = vmatprep.subr.mxu0 0.0
    %1159 = vmatpush1.msra.mxu0 0.0
    %1160 = vmatprep.subr.mxu0 0.0
    %1161 = vmatpush1.msra.mxu0 0.0
    %1162 = vmatprep.subr.mxu0 0.0
    %1163 = vmatpush1.msra.mxu0 0.0
    %1164 = vmatprep.subr.mxu0 0.0
    %1165 = vmatpush1.msra.mxu0 0.0
    %1166 = vmatprep.subr.mxu0 0.0
    %1167 = vmatpush1.msra.mxu0 0.0
    %1168 = vmatprep.subr.mxu0 0.0
    %1169 = vmatpush1.msra.mxu0 0.0
    %1170 = vmatprep.subr.mxu0 0.0
    %1171 = vmatpush1.msra.mxu0 0.0
    %1172 = vmatprep.subr.mxu0 0.0
    %1173 = vmatpush1.msra.mxu0 0.0
    %1174 = vmatprep.subr.mxu0 0.0
    %1175 = vmatpush1.msra.mxu0 0.0
    %1176 = vmatprep.subr.mxu0 0.0
    %1177 = vmatpush1.msra.mxu0 0.0
    %1178 = vmatprep.subr.mxu0 0.0
    %1179 = vmatpush1.msra.mxu0 0.0
    %1180 = vmatprep.subr.mxu0 0.0
    %1181 = vmatpush1.msra.mxu0 0.0
    %1182 = vmatprep.subr.mxu0 0.0
    %1183 = vmatpush1.msra.mxu0 0.0
    %1184 = vmatprep.mubr.f32.mxu0 0.0
    %v1185 = vand.u32 %v83, 4294901760
    %v1186 = vsub.f32 %v83, %v1185
    %v1187 = vand.u32 %v1186, 4294901760
    %1188 = vmatmul.mubr.f32.gmra.mrb[0].mxu0 %v1187
    %v1189 = vpop.f32.mrb[0].mxu0
    %v1190 = vadd.f32 %v1101, %v1189
    %v1191 = vpop.f32.mrb[0].mxu0
    %1192 = vdwg.mxu0
    %1193 = vmatprep.subr.mxu0 0.0
    %v1194 = vand.u32 %v84, 4294901760
    %v1195 = vsub.f32 %v84, %v1194
    %v1196 = vand.u32 %v1195, 4294901760
    %1197 = vmatpush1.msra.mxu0 %v1196
    %1198 = vmatprep.subr.mxu0 0.0
    %v1199 = vand.u32 %v85, 4294901760
    %v1200 = vsub.f32 %v85, %v1199
    %v1201 = vand.u32 %v1200, 4294901760
    %1202 = vmatpush1.msra.mxu0 %v1201
    %1203 = vmatprep.subr.mxu0 0.0
    %v1204 = vand.u32 %v86, 4294901760
    %v1205 = vsub.f32 %v86, %v1204
    %v1206 = vand.u32 %v1205, 4294901760
    %1207 = vmatpush1.msra.mxu0 %v1206
    %1208 = vmatprep.subr.mxu0 0.0
    %v1209 = vand.u32 %v87, 4294901760
    %v1210 = vsub.f32 %v87, %v1209
    %v1211 = vand.u32 %v1210, 4294901760
    %1212 = vmatpush1.msra.mxu0 %v1211
    %1213 = vmatprep.subr.mxu0 0.0
    %v1214 = vand.u32 %v88, 4294901760
    %v1215 = vsub.f32 %v88, %v1214
    %v1216 = vand.u32 %v1215, 4294901760
    %1217 = vmatpush1.msra.mxu0 %v1216
    %1218 = vmatprep.subr.mxu0 0.0
    %v1219 = vand.u32 %v89, 4294901760
    %v1220 = vsub.f32 %v89, %v1219
    %v1221 = vand.u32 %v1220, 4294901760
    %1222 = vmatpush1.msra.mxu0 %v1221
    %1223 = vmatprep.subr.mxu0 0.0
    %v1224 = vand.u32 %v90, 4294901760
    %v1225 = vsub.f32 %v90, %v1224
    %v1226 = vand.u32 %v1225, 4294901760
    %1227 = vmatpush1.msra.mxu0 %v1226
    %1228 = vmatprep.subr.mxu0 0.0
    %v1229 = vand.u32 %v91, 4294901760
    %v1230 = vsub.f32 %v91, %v1229
    %v1231 = vand.u32 %v1230, 4294901760
    %1232 = vmatpush1.msra.mxu0 %v1231
    %1233 = vmatprep.subr.mxu0 0.0
    %v1234 = vand.u32 %v92, 4294901760
    %v1235 = vsub.f32 %v92, %v1234
    %v1236 = vand.u32 %v1235, 4294901760
    %1237 = vmatpush1.msra.mxu0 %v1236
    %1238 = vmatprep.subr.mxu0 0.0
    %v1239 = vand.u32 %v93, 4294901760
    %v1240 = vsub.f32 %v93, %v1239
    %v1241 = vand.u32 %v1240, 4294901760
    %1242 = vmatpush1.msra.mxu0 %v1241
    %1243 = vmatprep.subr.mxu0 0.0
    %v1244 = vand.u32 %v94, 4294901760
    %v1245 = vsub.f32 %v94, %v1244
    %v1246 = vand.u32 %v1245, 4294901760
    %1247 = vmatpush1.msra.mxu0 %v1246
    %1248 = vmatprep.subr.mxu0 0.0
    %v1249 = vand.u32 %v95, 4294901760
    %v1250 = vsub.f32 %v95, %v1249
    %v1251 = vand.u32 %v1250, 4294901760
    %1252 = vmatpush1.msra.mxu0 %v1251
    %1253 = vmatprep.subr.mxu0 0.0
    %v1254 = vand.u32 %v96, 4294901760
    %v1255 = vsub.f32 %v96, %v1254
    %v1256 = vand.u32 %v1255, 4294901760
    %1257 = vmatpush1.msra.mxu0 %v1256
    %1258 = vmatprep.subr.mxu0 0.0
    %v1259 = vand.u32 %v97, 4294901760
    %v1260 = vsub.f32 %v97, %v1259
    %v1261 = vand.u32 %v1260, 4294901760
    %1262 = vmatpush1.msra.mxu0 %v1261
    %1263 = vmatprep.subr.mxu0 0.0
    %v1264 = vand.u32 %v98, 4294901760
    %v1265 = vsub.f32 %v98, %v1264
    %v1266 = vand.u32 %v1265, 4294901760
    %1267 = vmatpush1.msra.mxu0 %v1266
    %1268 = vmatprep.subr.mxu0 0.0
    %v1269 = vand.u32 %v99, 4294901760
    %v1270 = vsub.f32 %v99, %v1269
    %v1271 = vand.u32 %v1270, 4294901760
    %1272 = vmatpush1.msra.mxu0 %v1271
    %1273 = vmatprep.subr.mxu0 0.0
    %1274 = vmatpush1.msra.mxu0 0.0
    %1275 = vmatprep.subr.mxu0 0.0
    %1276 = vmatpush1.msra.mxu0 0.0
    %1277 = vmatprep.subr.mxu0 0.0
    %1278 = vmatpush1.msra.mxu0 0.0
    %1279 = vmatprep.subr.mxu0 0.0
    %1280 = vmatpush1.msra.mxu0 0.0
    %1281 = vmatprep.subr.mxu0 0.0
    %1282 = vmatpush1.msra.mxu0 0.0
    %1283 = vmatprep.subr.mxu0 0.0
    %1284 = vmatpush1.msra.mxu0 0.0
    %1285 = vmatprep.subr.mxu0 0.0
    %1286 = vmatpush1.msra.mxu0 0.0
    %1287 = vmatprep.subr.mxu0 0.0
    %1288 = vmatpush1.msra.mxu0 0.0
    %1289 = vmatprep.subr.mxu0 0.0
    %1290 = vmatpush1.msra.mxu0 0.0
    %1291 = vmatprep.subr.mxu0 0.0
    %1292 = vmatpush1.msra.mxu0 0.0
    %1293 = vmatprep.subr.mxu0 0.0
    %1294 = vmatpush1.msra.mxu0 0.0
    %1295 = vmatprep.subr.mxu0 0.0
    %1296 = vmatpush1.msra.mxu0 0.0
    %1297 = vmatprep.subr.mxu0 0.0
    %1298 = vmatpush1.msra.mxu0 0.0
    %1299 = vmatprep.subr.mxu0 0.0
    %1300 = vmatpush1.msra.mxu0 0.0
    %1301 = vmatprep.subr.mxu0 0.0
    %1302 = vmatpush1.msra.mxu0 0.0
    %1303 = vmatprep.subr.mxu0 0.0
    %1304 = vmatpush1.msra.mxu0 0.0
    %1305 = vmatprep.mubr.f32.mxu0 0.0
    %v1306 = vand.u32 %v83, 4294901760
    %1307 = vmatmul.mubr.f32.gmra.mrb[0].mxu0 %v1306
    %v1308 = vpop.f32.mrb[0].mxu0
    %v1309 = vadd.f32 %v1190, %v1308
    %v1310 = vpop.f32.mrb[0].mxu0
    %1311 = vdwg.mxu0
    %1312 = vmatprep.subr.mxu0 0.0
    %v1313 = vand.u32 %v84, 4294901760
    %1314 = vmatpush1.msra.mxu0 %v1313
    %1315 = vmatprep.subr.mxu0 0.0
    %v1316 = vand.u32 %v85, 4294901760
    %1317 = vmatpush1.msra.mxu0 %v1316
    %1318 = vmatprep.subr.mxu0 0.0
    %v1319 = vand.u32 %v86, 4294901760
    %1320 = vmatpush1.msra.mxu0 %v1319
    %1321 = vmatprep.subr.mxu0 0.0
    %v1322 = vand.u32 %v87, 4294901760
    %1323 = vmatpush1.msra.mxu0 %v1322
    %1324 = vmatprep.subr.mxu0 0.0
    %v1325 = vand.u32 %v88, 4294901760
    %1326 = vmatpush1.msra.mxu0 %v1325
    %1327 = vmatprep.subr.mxu0 0.0
    %v1328 = vand.u32 %v89, 4294901760
    %1329 = vmatpush1.msra.mxu0 %v1328
    %1330 = vmatprep.subr.mxu0 0.0
    %v1331 = vand.u32 %v90, 4294901760
    %1332 = vmatpush1.msra.mxu0 %v1331
    %1333 = vmatprep.subr.mxu0 0.0
    %v1334 = vand.u32 %v91, 4294901760
    %1335 = vmatpush1.msra.mxu0 %v1334
    %1336 = vmatprep.subr.mxu0 0.0
    %v1337 = vand.u32 %v92, 4294901760
    %1338 = vmatpush1.msra.mxu0 %v1337
    %1339 = vmatprep.subr.mxu0 0.0
    %v1340 = vand.u32 %v93, 4294901760
    %1341 = vmatpush1.msra.mxu0 %v1340
    %1342 = vmatprep.subr.mxu0 0.0
    %v1343 = vand.u32 %v94, 4294901760
    %1344 = vmatpush1.msra.mxu0 %v1343
    %1345 = vmatprep.subr.mxu0 0.0
    %v1346 = vand.u32 %v95, 4294901760
    %1347 = vmatpush1.msra.mxu0 %v1346
    %1348 = vmatprep.subr.mxu0 0.0
    %v1349 = vand.u32 %v96, 4294901760
    %1350 = vmatpush1.msra.mxu0 %v1349
    %1351 = vmatprep.subr.mxu0 0.0
    %v1352 = vand.u32 %v97, 4294901760
    %1353 = vmatpush1.msra.mxu0 %v1352
    %1354 = vmatprep.subr.mxu0 0.0
    %v1355 = vand.u32 %v98, 4294901760
    %1356 = vmatpush1.msra.mxu0 %v1355
    %1357 = vmatprep.subr.mxu0 0.0
    %v1358 = vand.u32 %v99, 4294901760
    %1359 = vmatpush1.msra.mxu0 %v1358
    %1360 = vmatprep.subr.mxu0 0.0
    %1361 = vmatpush1.msra.mxu0 0.0
    %1362 = vmatprep.subr.mxu0 0.0
    %1363 = vmatpush1.msra.mxu0 0.0
    %1364 = vmatprep.subr.mxu0 0.0
    %1365 = vmatpush1.msra.mxu0 0.0
    %1366 = vmatprep.subr.mxu0 0.0
    %1367 = vmatpush1.msra.mxu0 0.0
    %1368 = vmatprep.subr.mxu0 0.0
    %1369 = vmatpush1.msra.mxu0 0.0
    %1370 = vmatprep.subr.mxu0 0.0
    %1371 = vmatpush1.msra.mxu0 0.0
    %1372 = vmatprep.subr.mxu0 0.0
    %1373 = vmatpush1.msra.mxu0 0.0
    %1374 = vmatprep.subr.mxu0 0.0
    %1375 = vmatpush1.msra.mxu0 0.0
    %1376 = vmatprep.subr.mxu0 0.0
    %1377 = vmatpush1.msra.mxu0 0.0
    %1378 = vmatprep.subr.mxu0 0.0
    %1379 = vmatpush1.msra.mxu0 0.0
    %1380 = vmatprep.subr.mxu0 0.0
    %1381 = vmatpush1.msra.mxu0 0.0
    %1382 = vmatprep.subr.mxu0 0.0
    %1383 = vmatpush1.msra.mxu0 0.0
    %1384 = vmatprep.subr.mxu0 0.0
    %1385 = vmatpush1.msra.mxu0 0.0
    %1386 = vmatprep.subr.mxu0 0.0
    %1387 = vmatpush1.msra.mxu0 0.0
    %1388 = vmatprep.subr.mxu0 0.0
    %1389 = vmatpush1.msra.mxu0 0.0
    %1390 = vmatprep.subr.mxu0 0.0
    %1391 = vmatpush1.msra.mxu0 0.0
    %1392 = vmatprep.mubr.f32.mxu0 0.0
    %v1393 = vand.u32 %v83, 4294901760
    %1394 = vmatmul.mubr.f32.gmra.mrb[0].mxu0 %v1393
    %v1395 = vpop.f32.mrb[0].mxu0
    %v1396 = vadd.f32 %v1309, %v1395
    %v1397 = vpop.f32.mrb[0].mxu0
    %1398 = vdwg.mxu0
    %v1399 = vld [vmem:[#allocation10] sm:$0x1]
    %v1401 = vlaneseq
    %v1402 = vshrl.u32 %v1401, 7
    %v1403 = vsub.s32 0, %v1402
    %v1404 = vrot.slane %v1399, %v1403
    %v1406 = vadd.f32 %v1396, %v1404
    %1407 = vst [vmem:[#allocation11] sm:$0xff] %v1406
    // Predicated region
    $region42: #{tpu_custom_call.1} parent=1 // pred_check
      _
    $region43: #{tpu_custom_call.1} parent=1 // pred_check_branch
      %1409 = sbr.rel (0) target = $region45
    $region44: #{tpu_custom_call.1} parent=1 // pred_region
      %s1411 = ssub.s32 128, 128
      %1412 = vsyncadd [#allocation4], %s1411
      %s1414 = sshll.u32 [#allocation11], 4
      %s1415 = int_to_ptr.vmem [resolvable:$true] %s1414
      %1417 = dma.vmem_to_hbm [thread:$0]  %s1415, 128, %s5, [#allocation4]
    $region45: #{tpu_custom_call.1} parent=1 // pred_fallthru
      _
    // Predicated region
    $region46: #{tpu_custom_call.1} parent=1 // pred_check
      _
    $region47: #{tpu_custom_call.1} parent=1 // pred_check_branch
      %1419 = sbr.rel (0) target = $region49
    $region48: #{tpu_custom_call.1} parent=1 // pred_region
      %1420 = dma.done [#allocation4], 128
    $region49: #{tpu_custom_call.1} parent=1 // pred_fallthru
      _
    %1421 = vsyncpa [#allocation3], 1
    %1422 = vsyncpa [#allocation6], 1
    %1423 = vsyncpa [#allocation9], 1
    %1424 = vsyncpa [#allocation4], 1

</llo_original>
